<compile_context>
chip_gen: v7x
topology: tpu7x:2x2x1
jax: 0.10.0
libtpu: 0.0.40
codegen_flags: <defaults>
</compile_context>

<pallas_src>
import jax
import jax.numpy as jnp
from jax.experimental import pallas as pl
from jax.experimental.pallas import tpu as pltpu


# --------------------------------------------------------------------------- #
# Kernel
# --------------------------------------------------------------------------- #
def _make_kernel(*, lt, l_out, stride, has_proj, compute_dtype):
    """Kernel specialized (trace time) for tile size / stride / shortcut case."""
    ext = lt + 2  # h1 rows computed per tile: output rows +/- 1 halo for conv2

    def kernel(*refs):
        if has_proj:
            (x_ref, w1_ref, s1_ref, b1_ref, w2_ref, s2_ref, b2_ref,
             wsc_ref, ssc_ref, bsc_ref, out_ref, h1_scr) = refs
        else:
            (x_ref, w1_ref, s1_ref, b1_ref, w2_ref, s2_ref, b2_ref,
             out_ref, h1_scr) = refs

        t = pl.program_id(1)

        # ---- conv1 (k=3, stride folded into phase planes): one wide-K dot ---
        # x_ref: (stride, P, Cip) f32 phase planes; tap k of extended row e
        # lives at plane k % stride, row e + k // stride.
        taps = [x_ref[k % stride, pl.ds(k // stride, ext), :] for k in range(3)]
        xw = jnp.concatenate(taps, axis=-1).astype(compute_dtype)  # (ext, 3*Cip)
        acc1 = jnp.dot(xw, w1_ref[...], preferred_element_type=jnp.float32)
        h1 = jnp.maximum(acc1 * s1_ref[...] + b1_ref[...], 0.0)

        # zero h1 rows that fall outside the real sequence (conv2 zero padding
        # at the global boundaries + rows belonging to the padded L range)
        g = t * lt - 1 + jax.lax.broadcasted_iota(jnp.int32, (ext, 1), 0)
        h1 = jnp.where((g >= 0) & (g < l_out), h1, 0.0)
        h1_scr[...] = h1                                            # f32 scratch

        # ---- conv2 (k=3, stride=1, pad=1): one wide-K dot --------------------
        hw = jnp.concatenate([h1_scr[pl.ds(k, lt), :] for k in range(3)],
                             axis=-1).astype(compute_dtype)         # (lt, 3*Cop)
        acc2 = jnp.dot(hw, w2_ref[...], preferred_element_type=jnp.float32)
        h2 = acc2 * s2_ref[...] + b2_ref[...]

        # ---- shortcut (residual add in f32) ----------------------------------
        # x[:, stride*i, :] == plane 1 % stride, row i + 1 // stride + 1
        x_sc = x_ref[1 % stride, pl.ds(1 // stride + 1, lt), :]     # (lt, Cip) f32
        if has_proj:
            sc = jnp.dot(x_sc.astype(compute_dtype), wsc_ref[...],
                         preferred_element_type=jnp.float32)
            sc = sc * ssc_ref[...] + bsc_ref[...]
        else:
            sc = x_sc                                               # identity, f32

        out_ref[...] = jnp.maximum(h2 + sc, 0.0).astype(out_ref.dtype)

    return kernel


# --------------------------------------------------------------------------- #
# Wrapper helpers
# --------------------------------------------------------------------------- #
def _round_up(v, m):
    return (v + m - 1) // m * m


def _fold_bn(bn, cop, eps=1e-5):
    g, b, m, v = bn
    s = g / jnp.sqrt(v + eps)
    t = b - m * s
    c = g.shape[0]
    sp = jnp.zeros((1, cop), jnp.float32).at[0, :c].set(s)
    bp = jnp.zeros((1, cop), jnp.float32).at[0, :c].set(t)
    return sp, bp


def _pad_last2(a, r, c):
    pads = [(0, 0)] * (a.ndim - 2) + [(0, r - a.shape[-2]), (0, c - a.shape[-1])]
    return jnp.pad(a, pads)


# --------------------------------------------------------------------------- #
# Wrapper
# --------------------------------------------------------------------------- #
def basic_block_forward_nlc(x_nlc, params, stride=1,
                            compute_dtype=jnp.bfloat16,
                            out_dtype=jnp.float32,
                            l_tile=256):
    """Channels-last core: x_nlc (N, L, Cin) f32 -> (N, L_out, Cout) out_dtype."""
    n, length, cin = x_nlc.shape
    w1 = params["w1"]                       # (Cout, Cin, 3)
    w2 = params["w2"]                       # (Cout, Cout, 3)
    cout = w1.shape[0]
    s = int(stride)
    cip = _round_up(cin, 128)               # lane-dense channel padding
    cop = _round_up(cout, 128)
    l_out = (length - 1) // s + 1
    has_proj = (s != 1) or (cin != cout)
    cdt = compute_dtype

    # ---- sequence tiling -----------------------------------------------------
    lt = max(8, min(_round_up(l_out, 8), _round_up(int(l_tile), 8)))
    num_t = int(pl.cdiv(l_out, lt))
    l_out_pad = num_t * lt
    p_rows = lt + 4                         # rows per phase plane, per tile
    q_rows = l_out_pad + 4                  # rows per phase plane, global

    # ---- fold BN (inference) + pad / widen weights ---------------------------
    s1, b1 = _fold_bn(params["bn1"], cop)
    s2, b2 = _fold_bn(params["bn2"], cop)
    w1_w = _pad_last2(jnp.transpose(w1, (2, 1, 0)), cip, cop
                      ).reshape(3 * cip, cop).astype(cdt)        # (3*Cip, Cop)
    w2_w = _pad_last2(jnp.transpose(w2, (2, 1, 0)), cop, cop
                      ).reshape(3 * cop, cop).astype(cdt)        # (3*Cop, Cop)

    # ---- activations: zero-pad, de-interleave into `stride` phase planes, ----
    # ---- then materialize halo'd L-tiles (single ~1x extra HBM copy) ---------
    left = s + 1
    total = s * q_rows
    x_p = jnp.pad(x_nlc.astype(jnp.float32),
                  ((0, 0), (left, total - (length + left)), (0, cip - cin)))
    x_g = x_p.reshape(n, q_rows, s, cip).transpose(0, 2, 1, 3)    # (N, s, Q, Cip)
    x_tiles = jnp.stack([x_g[:, :, t * lt:t * lt + p_rows, :]
                         for t in range(num_t)], axis=1)          # (N, T, s, P, Cip)

    args = [x_tiles, w1_w, s1, b1, w2_w, s2, b2]
    if has_proj:
        wsc = _pad_last2(params["wsc"][:, :, 0].T, cip, cop).astype(cdt)
        ssc, bsc = _fold_bn(params["bnsc"], cop)
        args += [wsc, ssc, bsc]

    kernel = _make_kernel(lt=lt, l_out=l_out, stride=s, has_proj=has_proj,
                          compute_dtype=cdt)

    x_spec = pl.BlockSpec((None, None, s, p_rows, cip),
                          lambda b, t: (b, t, 0, 0, 0))
    out_spec = pl.BlockSpec((None, lt, cop), lambda b, t: (b, t, 0))
    out_shape = jax.ShapeDtypeStruct((n, l_out_pad, cop), out_dtype)
    scratch = [pltpu.VMEM((lt + 2, cop), jnp.float32)]

    # ---- VMEM budget / cost estimate -----------------------------------------
    def _nbytes(a):
        return int(a.size) * a.dtype.itemsize

    itemsize_c = jnp.dtype(cdt).itemsize
    x_blk = s * p_rows * cip * 4
    o_blk = lt * cop * jnp.dtype(out_dtype).itemsize
    const_b = sum(_nbytes(a) for a in args[1:])
    tmp_b = ((lt + 2) * 3 * cip * itemsize_c          # xw
             + 2 * (lt + 2) * cop * 4                 # acc1 / h1
             + lt * 3 * cop * itemsize_c              # hw
             + 3 * lt * cop * 4)                      # acc2 / shortcut / out
    est = (2 * x_blk + 2 * o_blk + 2 * const_b
           + (lt + 2) * cop * 4 + tmp_b)
    vmem_limit = int(min(64 * 1024 * 1024, max(32 * 1024 * 1024, 1.4 * est)))

    flops = 2 * n * l_out * cop * (3 * cip + 3 * cop + (cip if has_proj else 0))
    bytes_accessed = int(sum(_nbytes(a) for a in args)
                         + n * l_out_pad * cop * jnp.dtype(out_dtype).itemsize)

    def _call(single_buffer_consts):
        def const_spec(a):
            idx = lambda b, t, _nd=a.ndim: (0,) * _nd
            if single_buffer_consts:
                return pl.BlockSpec(tuple(a.shape), idx,
                                    pipeline_mode=pl.Buffered(1))
            return pl.BlockSpec(tuple(a.shape), idx)

        in_specs = [x_spec] + [const_spec(a) for a in args[1:]]
        return pl.pallas_call(
            kernel,
            out_shape=out_shape,
            grid=(n, num_t),
            in_specs=in_specs,
            out_specs=out_spec,
            scratch_shapes=scratch,
            compiler_params=pltpu.CompilerParams(
                dimension_semantics=("parallel", "parallel"),
                vmem_limit_bytes=vmem_limit),
            cost_estimate=pl.CostEstimate(flops=flops, transcendentals=0,
                                          bytes_accessed=bytes_accessed),
        )(*args)

    try:
        out = _call(True)
    except Exception:  # older Pallas without single-buffered pipeline_mode
        out = _call(False)

    return out[:, :l_out, :cout]


def basic_block_forward(x, params, stride=1, compute_dtype=jnp.bfloat16,
                        out_dtype=jnp.float32, l_tile=256):
    """PyTorch-layout entry point: x (N, Cin, L) -> (N, Cout, L_out)."""
    out_nlc = basic_block_forward_nlc(jnp.transpose(x, (0, 2, 1)), params,
                                      stride=stride,
                                      compute_dtype=compute_dtype,
                                      out_dtype=out_dtype, l_tile=l_tile)
    return jnp.transpose(out_nlc, (0, 2, 1))


# --------------------------------------------------------------------------- #
# Pure-JAX reference (PyTorch module in eval mode)
# --------------------------------------------------------------------------- #
def reference_forward(x, params, stride=1):
    eps = 1e-5

    def conv1d(h, w, s, p):
        return jax.lax.conv_general_dilated(
            h, w, window_strides=(s,), padding=[(p, p)],
            dimension_numbers=("NCH", "OIH", "NCH"))

    def bn(h, g, b, m, v):
        return ((h - m[None, :, None]) / jnp.sqrt(v[None, :, None] + eps)
                * g[None, :, None] + b[None, :, None])

    h = jax.nn.relu(bn(conv1d(x, params["w1"], stride, 1), *params["bn1"]))
    h = bn(conv1d(h, params["w2"], 1, 1), *params["bn2"])
    cin, cout = x.shape[1], params["w1"].shape[0]
    if stride != 1 or cin != cout:
        sc = bn(conv1d(x, params["wsc"], stride, 0), *params["bnsc"])
    else:
        sc = x
    return jax.nn.relu(h + sc)


# --------------------------------------------------------------------------- #
# Self-test
# --------------------------------------------------------------------------- #
if __name__ == "__main__":
    key = jax.random.PRNGKey(0)

    def bn_params(k, c):
        k1, k2, k3, k4 = jax.random.split(k, 4)
        g = 1.0 + 0.1 * jax.random.normal(k1, (c,), jnp.float32)
        b = 0.1 * jax.random.normal(k2, (c,), jnp.float32)
        m = 0.1 * jax.random.normal(k3, (c,), jnp.float32)
        v = 0.9 + 0.2 * jnp.abs(jax.random.normal(k4, (c,), jnp.float32))
        return (g, b, m, v)

    def make_params(k, cin, cout):
        ks = jax.random.split(k, 6)
        return {
            "w1": 0.2 * jax.random.normal(ks[0], (cout, cin, 3), jnp.float32),
            "bn1": bn_params(ks[1], cout),
            "w2": 0.2 * jax.random.normal(ks[2], (cout, cout, 3), jnp.float32),
            "bn2": bn_params(ks[3], cout),
            "wsc": 0.2 * jax.random.normal(ks[4], (cout, cin, 1), jnp.float32),
            "bnsc": bn_params(ks[5], cout),
        }

    N = 2
    k0, k1, k2, k3, k4 = jax.random.split(key, 5)

    # case A: channel-expanding block (projection shortcut)
    params_a = make_params(k0, 4, 8)
    x_a = jax.random.normal(k1, (N, 4, 16), jnp.float32)
    # case B: equal-channel block (identity shortcut at stride 1)
    params_b = make_params(k2, 8, 8)
    x_b = jax.random.normal(k3, (N, 8, 16), jnp.float32)
    # case C: L not a multiple of the tile -> multiple L tiles + halo masking
    x_c = jax.random.normal(k4, (N, 8, 20), jnp.float32)

    cases = [
        (x_a, params_a, 1, 256), (x_a, params_a, 2, 256),
        (x_b, params_b, 1, 256), (x_b, params_b, 2, 256),
        (x_c, params_b, 1, 8),   (x_c, params_b, 2, 8),
    ]
    for xt, pt, stride, l_tile in cases:
        ref = jax.block_until_ready(reference_forward(xt, pt, stride=stride))

        # exact-math path (f32 MXU inputs)
        out32 = jax.block_until_ready(
            basic_block_forward(xt, pt, stride=stride,
                                compute_dtype=jnp.float32, l_tile=l_tile))
        assert out32.shape == ref.shape, (out32.shape, ref.shape)
        err32 = float(jnp.max(jnp.abs(out32 - ref)))
        assert jnp.allclose(out32, ref, atol=1e-3, rtol=1e-3), \
            ("f32", stride, l_tile, err32)

        # default bf16 MXU path (f32 accumulate / epilogue / residual)
        outbf = jax.block_until_ready(
            basic_block_forward(xt, pt, stride=stride, l_tile=l_tile))
        errbf = float(jnp.max(jnp.abs(outbf - ref)))
        assert outbf.shape == ref.shape
        assert jnp.allclose(outbf, ref, atol=1e-1, rtol=1e-1), \
            ("bf16", stride, l_tile, errbf)

    print("KERNEL_OK")
</pallas_src>

<mosaic_0001>
module attributes {stable_mosaic.version = 11 : i64} {
  func.func @kernel(%arg0: i32, %arg1: i32, %arg2: memref<1x1x1x20x128xf32, #tpu.memory_space<vmem>>, %arg3: memref<384x128xf32, #tpu.memory_space<vmem>>, %arg4: memref<1x128xf32, #tpu.memory_space<vmem>>, %arg5: memref<1x128xf32, #tpu.memory_space<vmem>>, %arg6: memref<384x128xf32, #tpu.memory_space<vmem>>, %arg7: memref<1x128xf32, #tpu.memory_space<vmem>>, %arg8: memref<1x128xf32, #tpu.memory_space<vmem>>, %arg9: memref<128x128xf32, #tpu.memory_space<vmem>>, %arg10: memref<1x128xf32, #tpu.memory_space<vmem>>, %arg11: memref<1x128xf32, #tpu.memory_space<vmem>>, %arg12: memref<1x16x128xf32, #tpu.memory_space<vmem>>, %arg13: memref<18x128xf32, #tpu.memory_space<vmem>>) attributes {dimension_semantics = [#tpu.dimension_semantics<parallel>, #tpu.dimension_semantics<parallel>], iteration_bounds = array<i64: 2, 1>, scalar_prefetch = 0 : i64, scratch_operands = 1 : i64, tpu.core_type = #tpu.core_type<tc>, window_params = [{transform_indices = @transform_0, window_bounds = array<i64: 1, 1, 1, 20, 128>}, {pipeline_mode = #tpu.pipeline_mode<synchronous>, transform_indices = @transform_1, window_bounds = array<i64: 384, 128>}, {pipeline_mode = #tpu.pipeline_mode<synchronous>, transform_indices = @transform_2, window_bounds = array<i64: 1, 128>}, {pipeline_mode = #tpu.pipeline_mode<synchronous>, transform_indices = @transform_3, window_bounds = array<i64: 1, 128>}, {pipeline_mode = #tpu.pipeline_mode<synchronous>, transform_indices = @transform_4, window_bounds = array<i64: 384, 128>}, {pipeline_mode = #tpu.pipeline_mode<synchronous>, transform_indices = @transform_5, window_bounds = array<i64: 1, 128>}, {pipeline_mode = #tpu.pipeline_mode<synchronous>, transform_indices = @transform_6, window_bounds = array<i64: 1, 128>}, {pipeline_mode = #tpu.pipeline_mode<synchronous>, transform_indices = @transform_7, window_bounds = array<i64: 128, 128>}, {pipeline_mode = #tpu.pipeline_mode<synchronous>, transform_indices = @transform_8, window_bounds = array<i64: 1, 128>}, {pipeline_mode = #tpu.pipeline_mode<synchronous>, transform_indices = @transform_9, window_bounds = array<i64: 1, 128>}, {transform_indices = @transform_10, window_bounds = array<i64: 1, 16, 128>}]} {
    %c0 = arith.constant 0 : index
    %c0_0 = arith.constant 0 : index
    %c0_1 = arith.constant 0 : index
    %c0_2 = arith.constant 0 : index
    %c0_3 = arith.constant 0 : index
    %0 = vector.load %arg2[%c0, %c0_0, %c0_1, %c0_2, %c0_3] : memref<1x1x1x20x128xf32, #tpu.memory_space<vmem>>, vector<1x1x1x18x128xf32>
    %1 = vector.shape_cast %0 : vector<1x1x1x18x128xf32> to vector<18x128xf32>
    %c0_4 = arith.constant 0 : index
    %c0_5 = arith.constant 0 : index
    %c0_6 = arith.constant 0 : index
    %c1 = arith.constant 1 : index
    %c0_7 = arith.constant 0 : index
    %2 = vector.load %arg2[%c0_4, %c0_5, %c0_6, %c1, %c0_7] : memref<1x1x1x20x128xf32, #tpu.memory_space<vmem>>, vector<1x1x1x18x128xf32>
    %3 = vector.shape_cast %2 : vector<1x1x1x18x128xf32> to vector<18x128xf32>
    %c0_8 = arith.constant 0 : index
    %c0_9 = arith.constant 0 : index
    %c0_10 = arith.constant 0 : index
    %c2 = arith.constant 2 : index
    %c0_11 = arith.constant 0 : index
    %4 = vector.load %arg2[%c0_8, %c0_9, %c0_10, %c2, %c0_11] : memref<1x1x1x20x128xf32, #tpu.memory_space<vmem>>, vector<1x1x1x18x128xf32>
    %5 = vector.shape_cast %4 : vector<1x1x1x18x128xf32> to vector<18x128xf32>
    %6 = tpu.concatenate %1, %3, %5 in 1 : vector<18x128xf32>, vector<18x128xf32>, vector<18x128xf32> -> vector<18x384xf32>
    %c0_12 = arith.constant 0 : index
    %c0_13 = arith.constant 0 : index
    %7 = vector.load %arg3[%c0_12, %c0_13] : memref<384x128xf32, #tpu.memory_space<vmem>>, vector<384x128xf32>
    %cst = arith.constant dense<0.000000e+00> : vector<18x128xf32>
    %8 = tpu.matmul %6, %7, %cst {dimension_numbers = #tpu.dot_dimension_numbers<[1], [0], [0], [1], [0, 0, 1, 1], [], []>} : vector<18x384xf32>, vector<384x128xf32>, vector<18x128xf32> -> vector<18x128xf32>
    %c0_14 = arith.constant 0 : index
    %c0_15 = arith.constant 0 : index
    %9 = vector.load %arg4[%c0_14, %c0_15] : memref<1x128xf32, #tpu.memory_space<vmem>>, vector<1x128xf32>
    %10 = vector.broadcast %9 : vector<1x128xf32> to vector<18x128xf32>
    %11 = arith.mulf %8, %10 : vector<18x128xf32>
    %c0_16 = arith.constant 0 : index
    %c0_17 = arith.constant 0 : index
    %12 = vector.load %arg5[%c0_16, %c0_17] : memref<1x128xf32, #tpu.memory_space<vmem>>, vector<1x128xf32>
    %13 = vector.broadcast %12 : vector<1x128xf32> to vector<18x128xf32>
    %14 = arith.addf %11, %13 : vector<18x128xf32>
    %cst_18 = arith.constant 0.000000e+00 : f32
    %15 = vector.broadcast %cst_18 : f32 to vector<18x128xf32>
    %16 = arith.maximumf %14, %15 : vector<18x128xf32>
    %c16_i32 = arith.constant 16 : i32
    %17 = arith.muli %arg1, %c16_i32 : i32
    %c1_i32 = arith.constant 1 : i32
    %18 = arith.subi %17, %c1_i32 : i32
    %19 = tpu.iota {dimensions = array<i32: 0>} : vector<18x1xi32>
    %20 = vector.broadcast %18 : i32 to vector<18x1xi32>
    %21 = arith.addi %20, %19 : vector<18x1xi32>
    %c0_i32 = arith.constant 0 : i32
    %22 = vector.broadcast %c0_i32 : i32 to vector<18x1xi32>
    %23 = arith.cmpi sge, %21, %22 : vector<18x1xi32>
    %c16_i32_19 = arith.constant 16 : i32
    %24 = vector.broadcast %c16_i32_19 : i32 to vector<18x1xi32>
    %25 = arith.cmpi slt, %21, %24 : vector<18x1xi32>
    %26 = arith.andi %23, %25 : vector<18x1xi1>
    %cst_20 = arith.constant 0.000000e+00 : f32
    %27 = vector.shape_cast %26 : vector<18x1xi1> to vector<18x1xi1>
    %28 = vector.broadcast %27 : vector<18x1xi1> to vector<18x128xi1>
    %29 = vector.broadcast %cst_20 : f32 to vector<18x128xf32>
    %30 = arith.select %28, %16, %29 : vector<18x128xi1>, vector<18x128xf32>
    %c0_21 = arith.constant 0 : index
    %c0_22 = arith.constant 0 : index
    %31 = vector.load %arg13[%c0_21, %c0_22] : memref<18x128xf32, #tpu.memory_space<vmem>>, vector<18x128xf32>
    tpu.vector_store %arg13[%c0_21, %c0_22], %30 {strides = array<i32>} : memref<18x128xf32, #tpu.memory_space<vmem>>, vector<18x128xf32>,
    %c0_23 = arith.constant 0 : index
    %c0_24 = arith.constant 0 : index
    %32 = vector.load %arg13[%c0_23, %c0_24] : memref<18x128xf32, #tpu.memory_space<vmem>>, vector<16x128xf32>
    %c1_25 = arith.constant 1 : index
    %c0_26 = arith.constant 0 : index
    %33 = vector.load %arg13[%c1_25, %c0_26] : memref<18x128xf32, #tpu.memory_space<vmem>>, vector<16x128xf32>
    %c2_27 = arith.constant 2 : index
    %c0_28 = arith.constant 0 : index
    %34 = vector.load %arg13[%c2_27, %c0_28] : memref<18x128xf32, #tpu.memory_space<vmem>>, vector<16x128xf32>
    %35 = tpu.concatenate %32, %33, %34 in 1 : vector<16x128xf32>, vector<16x128xf32>, vector<16x128xf32> -> vector<16x384xf32>
    %c0_29 = arith.constant 0 : index
    %c0_30 = arith.constant 0 : index
    %36 = vector.load %arg6[%c0_29, %c0_30] : memref<384x128xf32, #tpu.memory_space<vmem>>, vector<384x128xf32>
    %cst_31 = arith.constant dense<0.000000e+00> : vector<16x128xf32>
    %37 = tpu.matmul %35, %36, %cst_31 {dimension_numbers = #tpu.dot_dimension_numbers<[1], [0], [0], [1], [0, 0, 1, 1], [], []>} : vector<16x384xf32>, vector<384x128xf32>, vector<16x128xf32> -> vector<16x128xf32>
    %c0_32 = arith.constant 0 : index
    %c0_33 = arith.constant 0 : index
    %38 = vector.load %arg7[%c0_32, %c0_33] : memref<1x128xf32, #tpu.memory_space<vmem>>, vector<1x128xf32>
    %39 = vector.broadcast %38 : vector<1x128xf32> to vector<16x128xf32>
    %40 = arith.mulf %37, %39 : vector<16x128xf32>
    %c0_34 = arith.constant 0 : index
    %c0_35 = arith.constant 0 : index
    %41 = vector.load %arg8[%c0_34, %c0_35] : memref<1x128xf32, #tpu.memory_space<vmem>>, vector<1x128xf32>
    %42 = vector.broadcast %41 : vector<1x128xf32> to vector<16x128xf32>
    %43 = arith.addf %40, %42 : vector<16x128xf32>
    %c0_36 = arith.constant 0 : index
    %c0_37 = arith.constant 0 : index
    %c0_38 = arith.constant 0 : index
    %c2_39 = arith.constant 2 : index
    %c0_40 = arith.constant 0 : index
    %44 = vector.load %arg2[%c0_36, %c0_37, %c0_38, %c2_39, %c0_40] : memref<1x1x1x20x128xf32, #tpu.memory_space<vmem>>, vector<1x1x1x16x128xf32>
    %45 = vector.shape_cast %44 : vector<1x1x1x16x128xf32> to vector<16x128xf32>
    %c0_41 = arith.constant 0 : index
    %c0_42 = arith.constant 0 : index
    %46 = vector.load %arg9[%c0_41, %c0_42] : memref<128x128xf32, #tpu.memory_space<vmem>>, vector<128x128xf32>
    %cst_43 = arith.constant dense<0.000000e+00> : vector<16x128xf32>
    %47 = tpu.matmul %45, %46, %cst_43 {dimension_numbers = #tpu.dot_dimension_numbers<[1], [0], [0], [1], [0, 0, 1, 1], [], []>} : vector<16x128xf32>, vector<128x128xf32>, vector<16x128xf32> -> vector<16x128xf32>
    %c0_44 = arith.constant 0 : index
    %c0_45 = arith.constant 0 : index
    %48 = vector.load %arg10[%c0_44, %c0_45] : memref<1x128xf32, #tpu.memory_space<vmem>>, vector<1x128xf32>
    %49 = vector.broadcast %48 : vector<1x128xf32> to vector<16x128xf32>
    %50 = arith.mulf %47, %49 : vector<16x128xf32>
    %c0_46 = arith.constant 0 : index
    %c0_47 = arith.constant 0 : index
    %51 = vector.load %arg11[%c0_46, %c0_47] : memref<1x128xf32, #tpu.memory_space<vmem>>, vector<1x128xf32>
    %52 = vector.broadcast %51 : vector<1x128xf32> to vector<16x128xf32>
    %53 = arith.addf %50, %52 : vector<16x128xf32>
    %54 = arith.addf %43, %53 : vector<16x128xf32>
    %cst_48 = arith.constant 0.000000e+00 : f32
    %55 = vector.broadcast %cst_48 : f32 to vector<16x128xf32>
    %56 = arith.maximumf %54, %55 : vector<16x128xf32>
    %c0_49 = arith.constant 0 : index
    %c0_50 = arith.constant 0 : index
    %c0_51 = arith.constant 0 : index
    %57 = vector.load %arg12[%c0_49, %c0_50, %c0_51] : memref<1x16x128xf32, #tpu.memory_space<vmem>>, vector<1x16x128xf32>
    %58 = vector.shape_cast %57 : vector<1x16x128xf32> to vector<16x128xf32>
    %59 = vector.shape_cast %56 : vector<16x128xf32> to vector<1x16x128xf32>
    tpu.vector_store %arg12[%c0_49, %c0_50, %c0_51], %59 {strides = array<i32>} : memref<1x16x128xf32, #tpu.memory_space<vmem>>, vector<1x16x128xf32>,
    return
  }
  func.func @transform_0(%arg0: i32, %arg1: i32) -> (i32, i32, i32, i32, i32) {
    %c0_i32 = arith.constant 0 : i32
    %c0_i32_0 = arith.constant 0 : i32
    %c0_i32_1 = arith.constant 0 : i32
    %c0_i32_2 = arith.constant 0 : i32
    return %arg0, %arg1, %c0_i32, %c0_i32_0, %c0_i32_1 : i32, i32, i32, i32, i32
  }
  func.func @transform_1(%arg0: i32, %arg1: i32) -> (i32, i32) {
    %c0_i32 = arith.constant 0 : i32
    %c0_i32_0 = arith.constant 0 : i32
    %c0_i32_1 = arith.constant 0 : i32
    return %c0_i32, %c0_i32_0 : i32, i32
  }
  func.func @transform_2(%arg0: i32, %arg1: i32) -> (i32, i32) {
    %c0_i32 = arith.constant 0 : i32
    %c0_i32_0 = arith.constant 0 : i32
    %c0_i32_1 = arith.constant 0 : i32
    return %c0_i32, %c0_i32_0 : i32, i32
  }
  func.func @transform_3(%arg0: i32, %arg1: i32) -> (i32, i32) {
    %c0_i32 = arith.constant 0 : i32
    %c0_i32_0 = arith.constant 0 : i32
    %c0_i32_1 = arith.constant 0 : i32
    return %c0_i32, %c0_i32_0 : i32, i32
  }
  func.func @transform_4(%arg0: i32, %arg1: i32) -> (i32, i32) {
    %c0_i32 = arith.constant 0 : i32
    %c0_i32_0 = arith.constant 0 : i32
    %c0_i32_1 = arith.constant 0 : i32
    return %c0_i32, %c0_i32_0 : i32, i32
  }
  func.func @transform_5(%arg0: i32, %arg1: i32) -> (i32, i32) {
    %c0_i32 = arith.constant 0 : i32
    %c0_i32_0 = arith.constant 0 : i32
    %c0_i32_1 = arith.constant 0 : i32
    return %c0_i32, %c0_i32_0 : i32, i32
  }
  func.func @transform_6(%arg0: i32, %arg1: i32) -> (i32, i32) {
    %c0_i32 = arith.constant 0 : i32
    %c0_i32_0 = arith.constant 0 : i32
    %c0_i32_1 = arith.constant 0 : i32
    return %c0_i32, %c0_i32_0 : i32, i32
  }
  func.func @transform_7(%arg0: i32, %arg1: i32) -> (i32, i32) {
    %c0_i32 = arith.constant 0 : i32
    %c0_i32_0 = arith.constant 0 : i32
    %c0_i32_1 = arith.constant 0 : i32
    return %c0_i32, %c0_i32_0 : i32, i32
  }
  func.func @transform_8(%arg0: i32, %arg1: i32) -> (i32, i32) {
    %c0_i32 = arith.constant 0 : i32
    %c0_i32_0 = arith.constant 0 : i32
    %c0_i32_1 = arith.constant 0 : i32
    return %c0_i32, %c0_i32_0 : i32, i32
  }
  func.func @transform_9(%arg0: i32, %arg1: i32) -> (i32, i32) {
    %c0_i32 = arith.constant 0 : i32
    %c0_i32_0 = arith.constant 0 : i32
    %c0_i32_1 = arith.constant 0 : i32
    return %c0_i32, %c0_i32_0 : i32, i32
  }
  func.func @transform_10(%arg0: i32, %arg1: i32) -> (i32, i32, i32) {
    %c0_i32 = arith.constant 0 : i32
    %c0_i32_0 = arith.constant 0 : i32
    return %arg0, %arg1, %c0_i32 : i32, i32, i32
  }
}

module attributes {stable_mosaic.version = 11 : i64} {
  func.func @kernel(%arg0: i32, %arg1: i32, %arg2: memref<1x1x1x20x128xf32, #tpu.memory_space<vmem>>, %arg3: memref<384x128xf32, #tpu.memory_space<vmem>>, %arg4: memref<1x128xf32, #tpu.memory_space<vmem>>, %arg5: memref<1x128xf32, #tpu.memory_space<vmem>>, %arg6: memref<384x128xf32, #tpu.memory_space<vmem>>, %arg7: memref<1x128xf32, #tpu.memory_space<vmem>>, %arg8: memref<1x128xf32, #tpu.memory_space<vmem>>, %arg9: memref<128x128xf32, #tpu.memory_space<vmem>>, %arg10: memref<1x128xf32, #tpu.memory_space<vmem>>, %arg11: memref<1x128xf32, #tpu.memory_space<vmem>>, %arg12: memref<1x16x128xf32, #tpu.memory_space<vmem>>, %arg13: memref<18x128xf32, #tpu.memory_space<vmem>>) attributes {dimension_semantics = [#tpu.dimension_semantics<parallel>, #tpu.dimension_semantics<parallel>], iteration_bounds = array<i64: 2, 1>, scalar_prefetch = 0 : i64, scratch_operands = 1 : i64, tpu.core_type = #tpu.core_type<tc>, window_params = [{transform_indices = @transform_0, window_bounds = array<i64: 1, 1, 1, 20, 128>}, {pipeline_mode = #tpu.pipeline_mode<synchronous>, transform_indices = @transform_1, window_bounds = array<i64: 384, 128>}, {pipeline_mode = #tpu.pipeline_mode<synchronous>, transform_indices = @transform_2, window_bounds = array<i64: 1, 128>}, {pipeline_mode = #tpu.pipeline_mode<synchronous>, transform_indices = @transform_3, window_bounds = array<i64: 1, 128>}, {pipeline_mode = #tpu.pipeline_mode<synchronous>, transform_indices = @transform_4, window_bounds = array<i64: 384, 128>}, {pipeline_mode = #tpu.pipeline_mode<synchronous>, transform_indices = @transform_5, window_bounds = array<i64: 1, 128>}, {pipeline_mode = #tpu.pipeline_mode<synchronous>, transform_indices = @transform_6, window_bounds = array<i64: 1, 128>}, {pipeline_mode = #tpu.pipeline_mode<synchronous>, transform_indices = @transform_7, window_bounds = array<i64: 128, 128>}, {pipeline_mode = #tpu.pipeline_mode<synchronous>, transform_indices = @transform_8, window_bounds = array<i64: 1, 128>}, {pipeline_mode = #tpu.pipeline_mode<synchronous>, transform_indices = @transform_9, window_bounds = array<i64: 1, 128>}, {transform_indices = @transform_10, window_bounds = array<i64: 1, 16, 128>}]} {
    %c0 = arith.constant 0 : index
    %c0_0 = arith.constant 0 : index
    %c0_1 = arith.constant 0 : index
    %c0_2 = arith.constant 0 : index
    %c0_3 = arith.constant 0 : index
    %0 = vector.load %arg2[%c0, %c0_0, %c0_1, %c0_2, %c0_3] : memref<1x1x1x20x128xf32, #tpu.memory_space<vmem>>, vector<1x1x1x18x128xf32>
    %1 = vector.shape_cast %0 : vector<1x1x1x18x128xf32> to vector<18x128xf32>
    %c0_4 = arith.constant 0 : index
    %c0_5 = arith.constant 0 : index
    %c0_6 = arith.constant 0 : index
    %c1 = arith.constant 1 : index
    %c0_7 = arith.constant 0 : index
    %2 = vector.load %arg2[%c0_4, %c0_5, %c0_6, %c1, %c0_7] : memref<1x1x1x20x128xf32, #tpu.memory_space<vmem>>, vector<1x1x1x18x128xf32>
    %3 = vector.shape_cast %2 : vector<1x1x1x18x128xf32> to vector<18x128xf32>
    %c0_8 = arith.constant 0 : index
    %c0_9 = arith.constant 0 : index
    %c0_10 = arith.constant 0 : index
    %c2 = arith.constant 2 : index
    %c0_11 = arith.constant 0 : index
    %4 = vector.load %arg2[%c0_8, %c0_9, %c0_10, %c2, %c0_11] : memref<1x1x1x20x128xf32, #tpu.memory_space<vmem>>, vector<1x1x1x18x128xf32>
    %5 = vector.shape_cast %4 : vector<1x1x1x18x128xf32> to vector<18x128xf32>
    %6 = tpu.concatenate %1, %3, %5 in 1 : vector<18x128xf32>, vector<18x128xf32>, vector<18x128xf32> -> vector<18x384xf32>
    %c0_12 = arith.constant 0 : index
    %c0_13 = arith.constant 0 : index
    %7 = vector.load %arg3[%c0_12, %c0_13] : memref<384x128xf32, #tpu.memory_space<vmem>>, vector<384x128xf32>
    %cst = arith.constant dense<0.000000e+00> : vector<18x128xf32>
    %8 = tpu.matmul %6, %7, %cst {dimension_numbers = #tpu.dot_dimension_numbers<[1], [0], [0], [1], [0, 0, 1, 1], [], []>} : vector<18x384xf32>, vector<384x128xf32>, vector<18x128xf32> -> vector<18x128xf32>
    %c0_14 = arith.constant 0 : index
    %c0_15 = arith.constant 0 : index
    %9 = vector.load %arg4[%c0_14, %c0_15] : memref<1x128xf32, #tpu.memory_space<vmem>>, vector<1x128xf32>
    %10 = vector.broadcast %9 : vector<1x128xf32> to vector<18x128xf32>
    %11 = arith.mulf %8, %10 : vector<18x128xf32>
    %c0_16 = arith.constant 0 : index
    %c0_17 = arith.constant 0 : index
    %12 = vector.load %arg5[%c0_16, %c0_17] : memref<1x128xf32, #tpu.memory_space<vmem>>, vector<1x128xf32>
    %13 = vector.broadcast %12 : vector<1x128xf32> to vector<18x128xf32>
    %14 = arith.addf %11, %13 : vector<18x128xf32>
    %cst_18 = arith.constant 0.000000e+00 : f32
    %15 = vector.broadcast %cst_18 : f32 to vector<18x128xf32>
    %16 = arith.maximumf %14, %15 : vector<18x128xf32>
    %c16_i32 = arith.constant 16 : i32
    %17 = arith.muli %arg1, %c16_i32 : i32
    %c1_i32 = arith.constant 1 : i32
    %18 = arith.subi %17, %c1_i32 : i32
    %19 = tpu.iota {dimensions = array<i32: 0>} : vector<18x1xi32>
    %20 = vector.broadcast %18 : i32 to vector<18x1xi32>
    %21 = arith.addi %20, %19 : vector<18x1xi32>
    %c0_i32 = arith.constant 0 : i32
    %22 = vector.broadcast %c0_i32 : i32 to vector<18x1xi32>
    %23 = arith.cmpi sge, %21, %22 : vector<18x1xi32>
    %c16_i32_19 = arith.constant 16 : i32
    %24 = vector.broadcast %c16_i32_19 : i32 to vector<18x1xi32>
    %25 = arith.cmpi slt, %21, %24 : vector<18x1xi32>
    %26 = arith.andi %23, %25 : vector<18x1xi1>
    %cst_20 = arith.constant 0.000000e+00 : f32
    %27 = vector.shape_cast %26 : vector<18x1xi1> to vector<18x1xi1>
    %28 = vector.broadcast %27 : vector<18x1xi1> to vector<18x128xi1>
    %29 = vector.broadcast %cst_20 : f32 to vector<18x128xf32>
    %30 = arith.select %28, %16, %29 : vector<18x128xi1>, vector<18x128xf32>
    %c0_21 = arith.constant 0 : index
    %c0_22 = arith.constant 0 : index
    %31 = vector.load %arg13[%c0_21, %c0_22] : memref<18x128xf32, #tpu.memory_space<vmem>>, vector<18x128xf32>
    tpu.vector_store %arg13[%c0_21, %c0_22], %30 {strides = array<i32>} : memref<18x128xf32, #tpu.memory_space<vmem>>, vector<18x128xf32>,
    %c0_23 = arith.constant 0 : index
    %c0_24 = arith.constant 0 : index
    %32 = vector.load %arg13[%c0_23, %c0_24] : memref<18x128xf32, #tpu.memory_space<vmem>>, vector<16x128xf32>
    %c1_25 = arith.constant 1 : index
    %c0_26 = arith.constant 0 : index
    %33 = vector.load %arg13[%c1_25, %c0_26] : memref<18x128xf32, #tpu.memory_space<vmem>>, vector<16x128xf32>
    %c2_27 = arith.constant 2 : index
    %c0_28 = arith.constant 0 : index
    %34 = vector.load %arg13[%c2_27, %c0_28] : memref<18x128xf32, #tpu.memory_space<vmem>>, vector<16x128xf32>
    %35 = tpu.concatenate %32, %33, %34 in 1 : vector<16x128xf32>, vector<16x128xf32>, vector<16x128xf32> -> vector<16x384xf32>
    %c0_29 = arith.constant 0 : index
    %c0_30 = arith.constant 0 : index
    %36 = vector.load %arg6[%c0_29, %c0_30] : memref<384x128xf32, #tpu.memory_space<vmem>>, vector<384x128xf32>
    %cst_31 = arith.constant dense<0.000000e+00> : vector<16x128xf32>
    %37 = tpu.matmul %35, %36, %cst_31 {dimension_numbers = #tpu.dot_dimension_numbers<[1], [0], [0], [1], [0, 0, 1, 1], [], []>} : vector<16x384xf32>, vector<384x128xf32>, vector<16x128xf32> -> vector<16x128xf32>
    %c0_32 = arith.constant 0 : index
    %c0_33 = arith.constant 0 : index
    %38 = vector.load %arg7[%c0_32, %c0_33] : memref<1x128xf32, #tpu.memory_space<vmem>>, vector<1x128xf32>
    %39 = vector.broadcast %38 : vector<1x128xf32> to vector<16x128xf32>
    %40 = arith.mulf %37, %39 : vector<16x128xf32>
    %c0_34 = arith.constant 0 : index
    %c0_35 = arith.constant 0 : index
    %41 = vector.load %arg8[%c0_34, %c0_35] : memref<1x128xf32, #tpu.memory_space<vmem>>, vector<1x128xf32>
    %42 = vector.broadcast %41 : vector<1x128xf32> to vector<16x128xf32>
    %43 = arith.addf %40, %42 : vector<16x128xf32>
    %c0_36 = arith.constant 0 : index
    %c0_37 = arith.constant 0 : index
    %c0_38 = arith.constant 0 : index
    %c2_39 = arith.constant 2 : index
    %c0_40 = arith.constant 0 : index
    %44 = vector.load %arg2[%c0_36, %c0_37, %c0_38, %c2_39, %c0_40] : memref<1x1x1x20x128xf32, #tpu.memory_space<vmem>>, vector<1x1x1x16x128xf32>
    %45 = vector.shape_cast %44 : vector<1x1x1x16x128xf32> to vector<16x128xf32>
    %c0_41 = arith.constant 0 : index
    %c0_42 = arith.constant 0 : index
    %46 = vector.load %arg9[%c0_41, %c0_42] : memref<128x128xf32, #tpu.memory_space<vmem>>, vector<128x128xf32>
    %cst_43 = arith.constant dense<0.000000e+00> : vector<16x128xf32>
    %47 = tpu.matmul %45, %46, %cst_43 {dimension_numbers = #tpu.dot_dimension_numbers<[1], [0], [0], [1], [0, 0, 1, 1], [], []>} : vector<16x128xf32>, vector<128x128xf32>, vector<16x128xf32> -> vector<16x128xf32>
    %c0_44 = arith.constant 0 : index
    %c0_45 = arith.constant 0 : index
    %48 = vector.load %arg10[%c0_44, %c0_45] : memref<1x128xf32, #tpu.memory_space<vmem>>, vector<1x128xf32>
    %49 = vector.broadcast %48 : vector<1x128xf32> to vector<16x128xf32>
    %50 = arith.mulf %47, %49 : vector<16x128xf32>
    %c0_46 = arith.constant 0 : index
    %c0_47 = arith.constant 0 : index
    %51 = vector.load %arg11[%c0_46, %c0_47] : memref<1x128xf32, #tpu.memory_space<vmem>>, vector<1x128xf32>
    %52 = vector.broadcast %51 : vector<1x128xf32> to vector<16x128xf32>
    %53 = arith.addf %50, %52 : vector<16x128xf32>
    %54 = arith.addf %43, %53 : vector<16x128xf32>
    %cst_48 = arith.constant 0.000000e+00 : f32
    %55 = vector.broadcast %cst_48 : f32 to vector<16x128xf32>
    %56 = arith.maximumf %54, %55 : vector<16x128xf32>
    %c0_49 = arith.constant 0 : index
    %c0_50 = arith.constant 0 : index
    %c0_51 = arith.constant 0 : index
    %57 = vector.load %arg12[%c0_49, %c0_50, %c0_51] : memref<1x16x128xf32, #tpu.memory_space<vmem>>, vector<1x16x128xf32>
    %58 = vector.shape_cast %57 : vector<1x16x128xf32> to vector<16x128xf32>
    %59 = vector.shape_cast %56 : vector<16x128xf32> to vector<1x16x128xf32>
    tpu.vector_store %arg12[%c0_49, %c0_50, %c0_51], %59 {strides = array<i32>} : memref<1x16x128xf32, #tpu.memory_space<vmem>>, vector<1x16x128xf32>,
    return
  }
  func.func @transform_0(%arg0: i32, %arg1: i32) -> (i32, i32, i32, i32, i32) {
    %c0_i32 = arith.constant 0 : i32
    %c0_i32_0 = arith.constant 0 : i32
    %c0_i32_1 = arith.constant 0 : i32
    %c0_i32_2 = arith.constant 0 : i32
    return %arg0, %arg1, %c0_i32, %c0_i32_0, %c0_i32_1 : i32, i32, i32, i32, i32
  }
  func.func @transform_1(%arg0: i32, %arg1: i32) -> (i32, i32) {
    %c0_i32 = arith.constant 0 : i32
    %c0_i32_0 = arith.constant 0 : i32
    %c0_i32_1 = arith.constant 0 : i32
    return %c0_i32, %c0_i32_0 : i32, i32
  }
  func.func @transform_2(%arg0: i32, %arg1: i32) -> (i32, i32) {
    %c0_i32 = arith.constant 0 : i32
    %c0_i32_0 = arith.constant 0 : i32
    %c0_i32_1 = arith.constant 0 : i32
    return %c0_i32, %c0_i32_0 : i32, i32
  }
  func.func @transform_3(%arg0: i32, %arg1: i32) -> (i32, i32) {
    %c0_i32 = arith.constant 0 : i32
    %c0_i32_0 = arith.constant 0 : i32
    %c0_i32_1 = arith.constant 0 : i32
    return %c0_i32, %c0_i32_0 : i32, i32
  }
  func.func @transform_4(%arg0: i32, %arg1: i32) -> (i32, i32) {
    %c0_i32 = arith.constant 0 : i32
    %c0_i32_0 = arith.constant 0 : i32
    %c0_i32_1 = arith.constant 0 : i32
    return %c0_i32, %c0_i32_0 : i32, i32
  }
  func.func @transform_5(%arg0: i32, %arg1: i32) -> (i32, i32) {
    %c0_i32 = arith.constant 0 : i32
    %c0_i32_0 = arith.constant 0 : i32
    %c0_i32_1 = arith.constant 0 : i32
    return %c0_i32, %c0_i32_0 : i32, i32
  }
  func.func @transform_6(%arg0: i32, %arg1: i32) -> (i32, i32) {
    %c0_i32 = arith.constant 0 : i32
    %c0_i32_0 = arith.constant 0 : i32
    %c0_i32_1 = arith.constant 0 : i32
    return %c0_i32, %c0_i32_0 : i32, i32
  }
  func.func @transform_7(%arg0: i32, %arg1: i32) -> (i32, i32) {
    %c0_i32 = arith.constant 0 : i32
    %c0_i32_0 = arith.constant 0 : i32
    %c0_i32_1 = arith.constant 0 : i32
    return %c0_i32, %c0_i32_0 : i32, i32
  }
  func.func @transform_8(%arg0: i32, %arg1: i32) -> (i32, i32) {
    %c0_i32 = arith.constant 0 : i32
    %c0_i32_0 = arith.constant 0 : i32
    %c0_i32_1 = arith.constant 0 : i32
    return %c0_i32, %c0_i32_0 : i32, i32
  }
  func.func @transform_9(%arg0: i32, %arg1: i32) -> (i32, i32) {
    %c0_i32 = arith.constant 0 : i32
    %c0_i32_0 = arith.constant 0 : i32
    %c0_i32_1 = arith.constant 0 : i32
    return %c0_i32, %c0_i32_0 : i32, i32
  }
  func.func @transform_10(%arg0: i32, %arg1: i32) -> (i32, i32, i32) {
    %c0_i32 = arith.constant 0 : i32
    %c0_i32_0 = arith.constant 0 : i32
    return %arg0, %arg1, %c0_i32 : i32, i32, i32
  }
}

</mosaic_0001>

<llo_original>
// kernel: tpu_custom_call.1
$region0: #{tpu_custom_call.1}
  #allocation0 [shape = 'u32[]', space=smem, size = 0x4, offset = 0x4, fixed_abs, tag = 'smem constant byte address 0x4 - core index']
  #allocation1 [shape = 'u32[144,128]{1,0:T(1,128)}', space=vmem, size = 0x12000, scoped, tag = 'internal scratch']
  #allocation2 [shape = 'f32[18,128]{1,0:T(8,128)}', space=vmem, size = 0x3000, scoped, tag = 'scratch operand']
  %s0 = inlined_call_operand.vmem [shape: f32[2,1,1,20,128], index: 0, kind: input, shape index: {}]
  %s1 = inlined_call_operand.hbm [shape: f32[384,128], index: 1, kind: input, shape index: {}]
  %s2 = inlined_call_operand.vmem [shape: f32[1,128], index: 2, kind: input, shape index: {}]
  %s3 = inlined_call_operand.vmem [shape: f32[1,128], index: 3, kind: input, shape index: {}]
  %s4 = inlined_call_operand.hbm [shape: f32[384,128], index: 4, kind: input, shape index: {}]
  %s5 = inlined_call_operand.vmem [shape: f32[1,128], index: 5, kind: input, shape index: {}]
  %s6 = inlined_call_operand.vmem [shape: f32[1,128], index: 6, kind: input, shape index: {}]
  %s7 = inlined_call_operand.hbm [shape: f32[128,128], index: 7, kind: input, shape index: {}]
  %s8 = inlined_call_operand.vmem [shape: f32[1,128], index: 8, kind: input, shape index: {}]
  %s9 = inlined_call_operand.vmem [shape: f32[1,128], index: 9, kind: input, shape index: {}]
  %s10 = inlined_call_operand.hbm [shape: f32[2,16,128], index: 10, kind: output, shape index: {}]
  %s11 = sld [smem:[#allocation0]]
  $region85: #{tpu_custom_call.1} parent=0
    _
  %s13 = ssub.s32 1, %s11
  %s14 = scalar_select 0, %s13, %s11
  $region1: #{tpu_custom_call.1} parent=0
    #allocation3 [shape = 'u8[196608]{0}', space=vmem, size = 0x30000, scoped, tag = 'input window, operand 1, single buffered']
    #allocation4 [shape = 's32[2]{0}', space=sflag, size = 0x8, scoped, tag = 'scoped memory for tpu_custom_call.1']
    #allocation5 [shape = 's32[2]{0}', space=sflag, size = 0x8, scoped, tag = 'scoped memory for tpu_custom_call.1']
    #allocation6 [shape = 'u8[196608]{0}', space=vmem, size = 0x30000, scoped, tag = 'input window, operand 4, single buffered']
    #allocation7 [shape = 's32[1]{0}', space=sflag, size = 0x4, scoped, tag = 'scoped memory for tpu_custom_call.1']
    #allocation8 [shape = 'u8[65536]{0}', space=vmem, size = 0x10000, scoped, tag = 'input window, operand 7, single buffered']
    #allocation9 [shape = 'u8[16384]{0}', space=vmem, size = 0x4000, scoped, tag = 'output window, operand 0']
    %15 = vsyncpa [#allocation4], 0
    %16 = vsyncpa [#allocation7], 0
    %17 = vsyncpa [#allocation5], 0
    %s18 = scalar_lea.sflag [#allocation5], 1
    %19 = vsyncpa %s18, 0
    loop: start=0, step=1, limit=4
    $region2: #{tpu_custom_call.1} parent=1 // loop_pre_header
      _
    $region3: #{tpu_custom_call.1} parent=1 // loop_header
      %s21 = sphi 0, %s25
      %p22 = scmp.ge.s32.totalorder %s21, 4
      %s28 = sphi 0, %s40
      %s29 = sphi 0, %s36
      %s30 = sphi 0, %s28
      %s31 = sphi 0, %s29
      %s32 = sphi 0, %s30
      %s33 = sphi 0, %s31
      %s45 = sphi 0, %s47
      %s48 = sphi 0, %s45
      %s49 = sphi 0, %s48
      %s65 = sphi 0, %s49
      %s69 = sphi 0, %s69
      %s71 = sphi 0, %s69
      %s72 = sphi 0, %s71
      %s86 = sphi 0, %s72
      %s90 = sphi 0, %s90
      %s92 = sphi 0, %s90
      %s93 = sphi 0, %s92
      %s107 = sphi 0, %s93
      %s111 = sphi 0, %s111
      %s113 = sphi 0, %s111
      %s114 = sphi 0, %s113
      %s128 = sphi 0, %s114
      %s132 = sphi 0, %s132
      %s134 = sphi 0, %s132
      %s135 = sphi 0, %s134
      %s149 = sphi 0, %s135
      %s153 = sphi 0, %s153
      %s155 = sphi 0, %s153
      %s156 = sphi 0, %s155
      %s170 = sphi 0, %s156
      %s174 = sphi 0, %s174
      %s176 = sphi 0, %s174
      %s177 = sphi 0, %s176
      %s191 = sphi 0, %s177
      %s195 = sphi 0, %s195
      %s197 = sphi 0, %s195
      %s198 = sphi 0, %s197
      %s212 = sphi 0, %s198
      %s216 = sphi 0, %s216
      %s218 = sphi 0, %s216
      %s219 = sphi 0, %s218
      %s233 = sphi 0, %s219
      %s237 = sphi 0, %s237
      %s239 = sphi 0, %s237
      %s240 = sphi 0, %s239
      %s254 = sphi 0, %s240
      %s262 = sphi 0, %s264
      %s265 = sphi 0, %s262
      %s266 = sphi 0, %s265
      %s282 = sphi 0, %s266
    $region4: #{tpu_custom_call.1} parent=1 // loop_header_branch
      %24 = sbr.rel (%p22) target = $region8
    $region5: #{tpu_custom_call.1} parent=1 // loop_body
      %s26 = ssub.s32 %s21, 1
      %s27 = ssub.s32 %s21, 2
      %s34 = sadd.s32 1, %s29
      %p35 = scmp.ge.s32.totalorder %s34, 1
      %s36 = scalar_select %p35, 0, %s34
      %s37 = sadd.s32 1, %s28
      %s38 = scalar_select %p35, %s37, %s28
      %p39 = scmp.ge.s32.totalorder %s38, 2
      %s40 = scalar_select %p39, 0, %s38
      %s41 = ssub.s32 %s28, %s40
      %s42 = ssub.s32 %s29, %s36
      %s43 = sor.u32 %s41, %s42
      %p44 = scmp.eq.s32.totalorder %s43, 0
      %s46 = sadd.s32 %s45, 1
      %s47 = scalar_select %p44, %s45, %s46
      %p50 = pneg %p44
      %p51 = scmp.eq.s32.totalorder %s21, 1
      %p52 = por %p50, %p51
      %p53 = scmp.ne.s32.totalorder %s45, %s48
      %p54 = scmp.eq.s32.totalorder %s21, 0
      %p55 = por %p53, %p54
      %p56 = scmp.ne.s32.totalorder %s45, %s48
      %p57 = scmp.eq.s32.totalorder %s26, 1
      %p58 = por %p56, %p57
      %p59 = scmp.ne.s32.totalorder %s48, %s49
      %p60 = scmp.eq.s32.totalorder %s26, 0
      %p61 = por %p59, %p60
      %p62 = scmp.ne.s32.totalorder %s48, %s49
      %p63 = scmp.eq.s32.totalorder %s27, 1
      %p64 = por %p62, %p63
      %p66 = scmp.ne.s32.totalorder %s49, %s65
      %p67 = scmp.eq.s32.totalorder %s27, 0
      %p68 = por %p66, %p67
      %s70 = sadd.s32 %s69, 1
      %p73 = scmp.eq.s32.totalorder %s21, 1
      %p74 = scmp.ne.s32.totalorder %s69, %s71
      %p75 = scmp.eq.s32.totalorder %s21, 0
      %p76 = por %p74, %p75
      %p77 = scmp.ne.s32.totalorder %s69, %s71
      %p78 = scmp.eq.s32.totalorder %s26, 1
      %p79 = por %p77, %p78
      %p80 = scmp.ne.s32.totalorder %s71, %s72
      %p81 = scmp.eq.s32.totalorder %s26, 0
      %p82 = por %p80, %p81
      %p83 = scmp.ne.s32.totalorder %s71, %s72
      %p84 = scmp.eq.s32.totalorder %s27, 1
      %p85 = por %p83, %p84
      %p87 = scmp.ne.s32.totalorder %s72, %s86
      %p88 = scmp.eq.s32.totalorder %s27, 0
      %p89 = por %p87, %p88
      %s91 = sadd.s32 %s90, 1
      %p94 = scmp.eq.s32.totalorder %s21, 1
      %p95 = scmp.ne.s32.totalorder %s90, %s92
      %p96 = scmp.eq.s32.totalorder %s21, 0
      %p97 = por %p95, %p96
      %p98 = scmp.ne.s32.totalorder %s90, %s92
      %p99 = scmp.eq.s32.totalorder %s26, 1
      %p100 = por %p98, %p99
      %p101 = scmp.ne.s32.totalorder %s92, %s93
      %p102 = scmp.eq.s32.totalorder %s26, 0
      %p103 = por %p101, %p102
      %p104 = scmp.ne.s32.totalorder %s92, %s93
      %p105 = scmp.eq.s32.totalorder %s27, 1
      %p106 = por %p104, %p105
      %p108 = scmp.ne.s32.totalorder %s93, %s107
      %p109 = scmp.eq.s32.totalorder %s27, 0
      %p110 = por %p108, %p109
      %s112 = sadd.s32 %s111, 1
      %p115 = scmp.eq.s32.totalorder %s21, 1
      %p116 = scmp.ne.s32.totalorder %s111, %s113
      %p117 = scmp.eq.s32.totalorder %s21, 0
      %p118 = por %p116, %p117
      %p119 = scmp.ne.s32.totalorder %s111, %s113
      %p120 = scmp.eq.s32.totalorder %s26, 1
      %p121 = por %p119, %p120
      %p122 = scmp.ne.s32.totalorder %s113, %s114
      %p123 = scmp.eq.s32.totalorder %s26, 0
      %p124 = por %p122, %p123
      %p125 = scmp.ne.s32.totalorder %s113, %s114
      %p126 = scmp.eq.s32.totalorder %s27, 1
      %p127 = por %p125, %p126
      %p129 = scmp.ne.s32.totalorder %s114, %s128
      %p130 = scmp.eq.s32.totalorder %s27, 0
      %p131 = por %p129, %p130
      %s133 = sadd.s32 %s132, 1
      %p136 = scmp.eq.s32.totalorder %s21, 1
      %p137 = scmp.ne.s32.totalorder %s132, %s134
      %p138 = scmp.eq.s32.totalorder %s21, 0
      %p139 = por %p137, %p138
      %p140 = scmp.ne.s32.totalorder %s132, %s134
      %p141 = scmp.eq.s32.totalorder %s26, 1
      %p142 = por %p140, %p141
      %p143 = scmp.ne.s32.totalorder %s134, %s135
      %p144 = scmp.eq.s32.totalorder %s26, 0
      %p145 = por %p143, %p144
      %p146 = scmp.ne.s32.totalorder %s134, %s135
      %p147 = scmp.eq.s32.totalorder %s27, 1
      %p148 = por %p146, %p147
      %p150 = scmp.ne.s32.totalorder %s135, %s149
      %p151 = scmp.eq.s32.totalorder %s27, 0
      %p152 = por %p150, %p151
      %s154 = sadd.s32 %s153, 1
      %p157 = scmp.eq.s32.totalorder %s21, 1
      %p158 = scmp.ne.s32.totalorder %s153, %s155
      %p159 = scmp.eq.s32.totalorder %s21, 0
      %p160 = por %p158, %p159
      %p161 = scmp.ne.s32.totalorder %s153, %s155
      %p162 = scmp.eq.s32.totalorder %s26, 1
      %p163 = por %p161, %p162
      %p164 = scmp.ne.s32.totalorder %s155, %s156
      %p165 = scmp.eq.s32.totalorder %s26, 0
      %p166 = por %p164, %p165
      %p167 = scmp.ne.s32.totalorder %s155, %s156
      %p168 = scmp.eq.s32.totalorder %s27, 1
      %p169 = por %p167, %p168
      %p171 = scmp.ne.s32.totalorder %s156, %s170
      %p172 = scmp.eq.s32.totalorder %s27, 0
      %p173 = por %p171, %p172
      %s175 = sadd.s32 %s174, 1
      %p178 = scmp.eq.s32.totalorder %s21, 1
      %p179 = scmp.ne.s32.totalorder %s174, %s176
      %p180 = scmp.eq.s32.totalorder %s21, 0
      %p181 = por %p179, %p180
      %p182 = scmp.ne.s32.totalorder %s174, %s176
      %p183 = scmp.eq.s32.totalorder %s26, 1
      %p184 = por %p182, %p183
      %p185 = scmp.ne.s32.totalorder %s176, %s177
      %p186 = scmp.eq.s32.totalorder %s26, 0
      %p187 = por %p185, %p186
      %p188 = scmp.ne.s32.totalorder %s176, %s177
      %p189 = scmp.eq.s32.totalorder %s27, 1
      %p190 = por %p188, %p189
      %p192 = scmp.ne.s32.totalorder %s177, %s191
      %p193 = scmp.eq.s32.totalorder %s27, 0
      %p194 = por %p192, %p193
      %s196 = sadd.s32 %s195, 1
      %p199 = scmp.eq.s32.totalorder %s21, 1
      %p200 = scmp.ne.s32.totalorder %s195, %s197
      %p201 = scmp.eq.s32.totalorder %s21, 0
      %p202 = por %p200, %p201
      %p203 = scmp.ne.s32.totalorder %s195, %s197
      %p204 = scmp.eq.s32.totalorder %s26, 1
      %p205 = por %p203, %p204
      %p206 = scmp.ne.s32.totalorder %s197, %s198
      %p207 = scmp.eq.s32.totalorder %s26, 0
      %p208 = por %p206, %p207
      %p209 = scmp.ne.s32.totalorder %s197, %s198
      %p210 = scmp.eq.s32.totalorder %s27, 1
      %p211 = por %p209, %p210
      %p213 = scmp.ne.s32.totalorder %s198, %s212
      %p214 = scmp.eq.s32.totalorder %s27, 0
      %p215 = por %p213, %p214
      %s217 = sadd.s32 %s216, 1
      %p220 = scmp.eq.s32.totalorder %s21, 1
      %p221 = scmp.ne.s32.totalorder %s216, %s218
      %p222 = scmp.eq.s32.totalorder %s21, 0
      %p223 = por %p221, %p222
      %p224 = scmp.ne.s32.totalorder %s216, %s218
      %p225 = scmp.eq.s32.totalorder %s26, 1
      %p226 = por %p224, %p225
      %p227 = scmp.ne.s32.totalorder %s218, %s219
      %p228 = scmp.eq.s32.totalorder %s26, 0
      %p229 = por %p227, %p228
      %p230 = scmp.ne.s32.totalorder %s218, %s219
      %p231 = scmp.eq.s32.totalorder %s27, 1
      %p232 = por %p230, %p231
      %p234 = scmp.ne.s32.totalorder %s219, %s233
      %p235 = scmp.eq.s32.totalorder %s27, 0
      %p236 = por %p234, %p235
      %s238 = sadd.s32 %s237, 1
      %p241 = scmp.eq.s32.totalorder %s21, 1
      %p242 = scmp.ne.s32.totalorder %s237, %s239
      %p243 = scmp.eq.s32.totalorder %s21, 0
      %p244 = por %p242, %p243
      %p245 = scmp.ne.s32.totalorder %s237, %s239
      %p246 = scmp.eq.s32.totalorder %s26, 1
      %p247 = por %p245, %p246
      %p248 = scmp.ne.s32.totalorder %s239, %s240
      %p249 = scmp.eq.s32.totalorder %s26, 0
      %p250 = por %p248, %p249
      %p251 = scmp.ne.s32.totalorder %s239, %s240
      %p252 = scmp.eq.s32.totalorder %s27, 1
      %p253 = por %p251, %p252
      %p255 = scmp.ne.s32.totalorder %s240, %s254
      %p256 = scmp.eq.s32.totalorder %s27, 0
      %p257 = por %p255, %p256
      %s258 = ssub.s32 %s28, %s40
      %s259 = ssub.s32 %s29, %s36
      %s260 = sor.u32 %s258, %s259
      %p261 = scmp.eq.s32.totalorder %s260, 0
      %s263 = sadd.s32 %s262, 1
      %s264 = scalar_select %p261, %s262, %s263
      %p267 = pneg %p261
      %p268 = scmp.eq.s32.totalorder %s21, 1
      %p269 = por %p267, %p268
      %p270 = scmp.ne.s32.totalorder %s262, %s265
      %p271 = scmp.eq.s32.totalorder %s21, 0
      %p272 = por %p270, %p271
      %p273 = scmp.ne.s32.totalorder %s262, %s265
      %p274 = scmp.eq.s32.totalorder %s26, 1
      %p275 = por %p273, %p274
      %p276 = scmp.ne.s32.totalorder %s265, %s266
      %p277 = scmp.eq.s32.totalorder %s26, 0
      %p278 = por %p276, %p277
      %p279 = scmp.ne.s32.totalorder %s265, %s266
      %p280 = scmp.eq.s32.totalorder %s27, 1
      %p281 = por %p279, %p280
      %p283 = scmp.ne.s32.totalorder %s266, %s282
      %p284 = scmp.eq.s32.totalorder %s27, 0
      %p285 = por %p283, %p284
      %p286 = scmp.le.s32.totalorder 1, %s21
      %p287 = scmp.lt.s32.totalorder %s21, 3
      %p288 = pnand %p286, %p287
      %p289 = pneg %p288
      // Predicated region
      $region9: #{tpu_custom_call.1} parent=5 // pred_check
        _
      $region10: #{tpu_custom_call.1} parent=5 // pred_check_branch
        %291 = sbr.rel (%p288) target = $region12
      $region11: #{tpu_custom_call.1} parent=5 // pred_region
        %s292 = ssub.s32 %s21, 1
        // Predicated region
        $region13: #{tpu_custom_call.1} parent=11 // pred_check
          %p293 = pneg %p82
        $region14: #{tpu_custom_call.1} parent=11 // pred_check_branch
          %295 = sbr.rel (%p293) target = $region16
        $region15: #{tpu_custom_call.1} parent=11 // pred_region
          %s297 = ssub.s32 6144, 6144
          %298 = vsyncadd [#allocation4], %s297
          %s299 = sshll.u32 [#allocation3], 4
          %s300 = int_to_ptr.vmem [resolvable:$true] %s299
          %305 = dma.hbm_to_vmem [thread:$0]  %s1, 6144, %s300, [#allocation4], 128, 128, 8
        $region16: #{tpu_custom_call.1} parent=11 // pred_fallthru
          _
        // Predicated region
        $region17: #{tpu_custom_call.1} parent=11 // pred_check
          %p306 = pneg %p103
        $region18: #{tpu_custom_call.1} parent=11 // pred_check_branch
          %308 = sbr.rel (%p306) target = $region20
        $region19: #{tpu_custom_call.1} parent=11 // pred_region
          _
        $region20: #{tpu_custom_call.1} parent=11 // pred_fallthru
          _
        // Predicated region
        $region21: #{tpu_custom_call.1} parent=11 // pred_check
          %p309 = pneg %p124
        $region22: #{tpu_custom_call.1} parent=11 // pred_check_branch
          %311 = sbr.rel (%p309) target = $region24
        $region23: #{tpu_custom_call.1} parent=11 // pred_region
          _
        $region24: #{tpu_custom_call.1} parent=11 // pred_fallthru
          _
        // Predicated region
        $region25: #{tpu_custom_call.1} parent=11 // pred_check
          %p312 = pneg %p145
        $region26: #{tpu_custom_call.1} parent=11 // pred_check_branch
          %314 = sbr.rel (%p312) target = $region28
        $region27: #{tpu_custom_call.1} parent=11 // pred_region
          %s316 = ssub.s32 6144, 6144
          %317 = vsyncadd [#allocation7], %s316
          %s318 = sshll.u32 [#allocation6], 4
          %s319 = int_to_ptr.vmem [resolvable:$true] %s318
          %324 = dma.hbm_to_vmem [thread:$0]  %s4, 6144, %s319, [#allocation7], 128, 128, 8
        $region28: #{tpu_custom_call.1} parent=11 // pred_fallthru
          _
        // Predicated region
        $region29: #{tpu_custom_call.1} parent=11 // pred_check
          %p325 = pneg %p166
        $region30: #{tpu_custom_call.1} parent=11 // pred_check_branch
          %327 = sbr.rel (%p325) target = $region32
        $region31: #{tpu_custom_call.1} parent=11 // pred_region
          _
        $region32: #{tpu_custom_call.1} parent=11 // pred_fallthru
          _
        // Predicated region
        $region33: #{tpu_custom_call.1} parent=11 // pred_check
          %p328 = pneg %p187
        $region34: #{tpu_custom_call.1} parent=11 // pred_check_branch
          %330 = sbr.rel (%p328) target = $region36
        $region35: #{tpu_custom_call.1} parent=11 // pred_region
          _
        $region36: #{tpu_custom_call.1} parent=11 // pred_fallthru
          _
        // Predicated region
        $region37: #{tpu_custom_call.1} parent=11 // pred_check
          %p331 = pneg %p208
        $region38: #{tpu_custom_call.1} parent=11 // pred_check_branch
          %333 = sbr.rel (%p331) target = $region40
        $region39: #{tpu_custom_call.1} parent=11 // pred_region
          %s335 = ssub.s32 2048, 2048
          %336 = vsyncadd [#allocation7], %s335
          %s337 = sshll.u32 [#allocation8], 4
          %s338 = int_to_ptr.vmem [resolvable:$true] %s337
          %343 = dma.hbm_to_vmem [thread:$0]  %s7, 2048, %s338, [#allocation7], 128, 128, 8
        $region40: #{tpu_custom_call.1} parent=11 // pred_fallthru
          _
        // Predicated region
        $region41: #{tpu_custom_call.1} parent=11 // pred_check
          %p344 = pneg %p229
        $region42: #{tpu_custom_call.1} parent=11 // pred_check_branch
          %346 = sbr.rel (%p344) target = $region44
        $region43: #{tpu_custom_call.1} parent=11 // pred_region
          _
        $region44: #{tpu_custom_call.1} parent=11 // pred_fallthru
          _
        // Predicated region
        $region45: #{tpu_custom_call.1} parent=11 // pred_check
          %p347 = pneg %p250
        $region46: #{tpu_custom_call.1} parent=11 // pred_check_branch
          %349 = sbr.rel (%p347) target = $region48
        $region47: #{tpu_custom_call.1} parent=11 // pred_region
          _
        $region48: #{tpu_custom_call.1} parent=11 // pred_fallthru
          _
      $region12: #{tpu_custom_call.1} parent=5 // pred_fallthru
        _
      %p350 = scmp.lt.s32.totalorder %s21, 2
      // Predicated region
      $region49: #{tpu_custom_call.1} parent=5 // pred_check
        %p351 = pneg %p350
      $region50: #{tpu_custom_call.1} parent=5 // pred_check_branch
        %353 = sbr.rel (%p351) target = $region52
      $region51: #{tpu_custom_call.1} parent=5 // pred_region
        // Predicated region
        $region53: #{tpu_custom_call.1} parent=51 // pred_check
          %p354 = pneg %p55
        $region54: #{tpu_custom_call.1} parent=51 // pred_check_branch
          %356 = sbr.rel (%p354) target = $region56
        $region55: #{tpu_custom_call.1} parent=51 // pred_region
          %p357 = scmp.lt.s32.totalorder %s28, 1
          %s358 = scalar_select %p357, %s28, 1
          %p359 = scmp.lt.s32.totalorder %s29, 0
          %s360 = scalar_select %p359, %s29, 0
          %s361 = smul.addr %s360, 3
          %s362 = smul.addr %s358, 3
          %s363 = sadd.s32 %s361, %s362
          %s364 = smul.addr %s363, 8
          %s365 = scalar_lea.vmem %s0, %s364
        $region56: #{tpu_custom_call.1} parent=51 // pred_fallthru
          _
      $region52: #{tpu_custom_call.1} parent=5 // pred_fallthru
        _
      %p366 = scmp.le.s32.totalorder 1, %s21
      %p367 = scmp.lt.s32.totalorder %s21, 3
      %p368 = pnand %p366, %p367
      %p369 = pneg %p368
      // Predicated region
      $region57: #{tpu_custom_call.1} parent=5 // pred_check
        _
      $region58: #{tpu_custom_call.1} parent=5 // pred_check_branch
        %371 = sbr.rel (%p368) target = $region60
      $region59: #{tpu_custom_call.1} parent=5 // pred_region
        %s372 = ssub.s32 %s21, 1
        // Predicated region
        $region61: #{tpu_custom_call.1} parent=59 // pred_check
          %p373 = pneg %p82
        $region62: #{tpu_custom_call.1} parent=59 // pred_check_branch
          %375 = sbr.rel (%p373) target = $region64
        $region63: #{tpu_custom_call.1} parent=59 // pred_region
          %376 = dma.done [#allocation4], 6144
        $region64: #{tpu_custom_call.1} parent=59 // pred_fallthru
          _
        // Predicated region
        $region65: #{tpu_custom_call.1} parent=59 // pred_check
          %p377 = pneg %p145
        $region66: #{tpu_custom_call.1} parent=59 // pred_check_branch
          %379 = sbr.rel (%p377) target = $region68
        $region67: #{tpu_custom_call.1} parent=59 // pred_region
          %380 = dma.done [#allocation7], 6144
        $region68: #{tpu_custom_call.1} parent=59 // pred_fallthru
          _
        // Predicated region
        $region69: #{tpu_custom_call.1} parent=59 // pred_check
          %p381 = pneg %p208
        $region70: #{tpu_custom_call.1} parent=59 // pred_check_branch
          %383 = sbr.rel (%p381) target = $region72
        $region71: #{tpu_custom_call.1} parent=59 // pred_region
          %384 = dma.done [#allocation7], 2048
        $region72: #{tpu_custom_call.1} parent=59 // pred_fallthru
          _
        %p385 = scmp.lt.s32.totalorder %s30, 1
        %s386 = scalar_select %p385, %s30, 1
        %p387 = scmp.lt.s32.totalorder %s31, 0
        %s388 = scalar_select %p387, %s31, 0
        %s389 = smul.addr %s388, 3
        %s390 = smul.addr %s386, 3
        %s391 = sadd.s32 %s389, %s390
        %s392 = smul.addr %s391, 8
        %s393 = scalar_lea.vmem %s0, %s392
        %p394 = pneg %p61
        %p395 = pneg %p58
        %p396 = pneg %p82
        %p397 = pneg %p79
        %p398 = pneg %p103
        %p399 = pneg %p100
        %p400 = pneg %p124
        %p401 = pneg %p121
        %p402 = pneg %p145
        %p403 = pneg %p142
        %p404 = pneg %p166
        %p405 = pneg %p163
        %p406 = pneg %p187
        %p407 = pneg %p184
        %p408 = pneg %p208
        %p409 = pneg %p205
        %p410 = pneg %p229
        %p411 = pneg %p226
        %p412 = pneg %p250
        %p413 = pneg %p247
        %p414 = pneg %p278
        %p415 = pneg %p275
        %s416 = sand.u32 %s265, 1
        %s417 = scalar_lea.sflag [#allocation5], %s416
        %s418 = sand.u32 %s265, 1
        %s419 = smul.addr %s418, 16
        %s420 = scalar_lea.vmem [#allocation9], %s419
        %p421 = scmp.lt.s32.totalorder %s30, 1
        %s422 = scalar_select %p421, %s30, 1
        %p423 = scmp.lt.s32.totalorder %s31, 0
        %s424 = scalar_select %p423, %s31, 0
        %s425 = smul.addr %s424, 3
        %s426 = smul.addr %s422, 3
        %s427 = sadd.s32 %s425, %s426
        %s428 = smul.addr %s427, 8
        %s429 = scalar_lea.vmem %s0, %s428
        %s430 = smul.u32 2, %s31
        %v431 = vld [vmem:[%s429] sm:$0xff]
        %v432 = vld [vmem:[%s429 + $0x8] sm:$0xff]
        %v433 = vld [vmem:[%s429 + $0x10] sm:$0x3]
        %v434 = vld [vmem:[%s429 + $0x1] sm:$0xff]
        %v435 = vld [vmem:[%s429 + $0x9] sm:$0xff]
        %v436 = vld [vmem:[%s429 + $0x11] sm:$0x3]
        %v437 = vld [vmem:[%s429 + $0x2] sm:$0xff]
        %v438 = vld [vmem:[%s429 + $0xa] sm:$0xff]
        %v439 = vld [vmem:[%s429 + $0x12] sm:$0x3]
        %v440 = vld [vmem:[#allocation3] sm:$0xff]
        %v441 = vld [vmem:[#allocation3 + $0x8] sm:$0xff]
        %v442 = vld [vmem:[#allocation3 + $0x10] sm:$0xff]
        %v443 = vld [vmem:[#allocation3 + $0x18] sm:$0xff]
        %v444 = vld [vmem:[#allocation3 + $0x20] sm:$0xff]
        %v445 = vld [vmem:[#allocation3 + $0x28] sm:$0xff]
        %v446 = vld [vmem:[#allocation3 + $0x30] sm:$0xff]
        %v447 = vld [vmem:[#allocation3 + $0x38] sm:$0xff]
        %v448 = vld [vmem:[#allocation3 + $0x40] sm:$0xff]
        %v449 = vld [vmem:[#allocation3 + $0x48] sm:$0xff]
        %v450 = vld [vmem:[#allocation3 + $0x50] sm:$0xff]
        %v451 = vld [vmem:[#allocation3 + $0x58] sm:$0xff]
        %v452 = vld [vmem:[#allocation3 + $0x60] sm:$0xff]
        %v453 = vld [vmem:[#allocation3 + $0x68] sm:$0xff]
        %v454 = vld [vmem:[#allocation3 + $0x70] sm:$0xff]
        %v455 = vld [vmem:[#allocation3 + $0x78] sm:$0xff]
        %v456 = vld [vmem:[#allocation3 + $0x80] sm:$0xff]
        %v457 = vld [vmem:[#allocation3 + $0x88] sm:$0xff]
        %v458 = vld [vmem:[#allocation3 + $0x90] sm:$0xff]
        %v459 = vld [vmem:[#allocation3 + $0x98] sm:$0xff]
        %v460 = vld [vmem:[#allocation3 + $0xa0] sm:$0xff]
        %v461 = vld [vmem:[#allocation3 + $0xa8] sm:$0xff]
        %v462 = vld [vmem:[#allocation3 + $0xb0] sm:$0xff]
        %v463 = vld [vmem:[#allocation3 + $0xb8] sm:$0xff]
        %v464 = vld [vmem:[#allocation3 + $0xc0] sm:$0xff]
        %v465 = vld [vmem:[#allocation3 + $0xc8] sm:$0xff]
        %v466 = vld [vmem:[#allocation3 + $0xd0] sm:$0xff]
        %v467 = vld [vmem:[#allocation3 + $0xd8] sm:$0xff]
        %v468 = vld [vmem:[#allocation3 + $0xe0] sm:$0xff]
        %v469 = vld [vmem:[#allocation3 + $0xe8] sm:$0xff]
        %v470 = vld [vmem:[#allocation3 + $0xf0] sm:$0xff]
        %v471 = vld [vmem:[#allocation3 + $0xf8] sm:$0xff]
        %v472 = vld [vmem:[#allocation3 + $0x100] sm:$0xff]
        %v473 = vld [vmem:[#allocation3 + $0x108] sm:$0xff]
        %v474 = vld [vmem:[#allocation3 + $0x110] sm:$0xff]
        %v475 = vld [vmem:[#allocation3 + $0x118] sm:$0xff]
        %v476 = vld [vmem:[#allocation3 + $0x120] sm:$0xff]
        %v477 = vld [vmem:[#allocation3 + $0x128] sm:$0xff]
        %v478 = vld [vmem:[#allocation3 + $0x130] sm:$0xff]
        %v479 = vld [vmem:[#allocation3 + $0x138] sm:$0xff]
        %v480 = vld [vmem:[#allocation3 + $0x140] sm:$0xff]
        %v481 = vld [vmem:[#allocation3 + $0x148] sm:$0xff]
        %v482 = vld [vmem:[#allocation3 + $0x150] sm:$0xff]
        %v483 = vld [vmem:[#allocation3 + $0x158] sm:$0xff]
        %v484 = vld [vmem:[#allocation3 + $0x160] sm:$0xff]
        %v485 = vld [vmem:[#allocation3 + $0x168] sm:$0xff]
        %v486 = vld [vmem:[#allocation3 + $0x170] sm:$0xff]
        %v487 = vld [vmem:[#allocation3 + $0x178] sm:$0xff]
        %488 = vmatprep.subr.mxu0 0.0
        %489 = vmatpush1.msra.mxu0 %v440
        %490 = vmatprep.subr.mxu0 0.0
        %491 = vmatpush1.msra.mxu0 %v441
        %492 = vmatprep.subr.mxu0 0.0
        %493 = vmatpush1.msra.mxu0 %v442
        %494 = vmatprep.subr.mxu0 0.0
        %495 = vmatpush1.msra.mxu0 %v443
        %496 = vmatprep.subr.mxu0 0.0
        %497 = vmatpush1.msra.mxu0 %v444
        %498 = vmatprep.subr.mxu0 0.0
        %499 = vmatpush1.msra.mxu0 %v445
        %500 = vmatprep.subr.mxu0 0.0
        %501 = vmatpush1.msra.mxu0 %v446
        %502 = vmatprep.subr.mxu0 0.0
        %503 = vmatpush1.msra.mxu0 %v447
        %504 = vmatprep.subr.mxu0 0.0
        %505 = vmatpush1.msra.mxu0 %v448
        %506 = vmatprep.subr.mxu0 0.0
        %507 = vmatpush1.msra.mxu0 %v449
        %508 = vmatprep.subr.mxu0 0.0
        %509 = vmatpush1.msra.mxu0 %v450
        %510 = vmatprep.subr.mxu0 0.0
        %511 = vmatpush1.msra.mxu0 %v451
        %512 = vmatprep.subr.mxu0 0.0
        %513 = vmatpush1.msra.mxu0 %v452
        %514 = vmatprep.subr.mxu0 0.0
        %515 = vmatpush1.msra.mxu0 %v453
        %516 = vmatprep.subr.mxu0 0.0
        %517 = vmatpush1.msra.mxu0 %v454
        %518 = vmatprep.subr.mxu0 0.0
        %519 = vmatpush1.msra.mxu0 %v455
        %520 = vmatprep.subr.mxu0 0.0
        %521 = vmatpush1.msra.mxu0 %v456
        %522 = vmatprep.subr.mxu0 0.0
        %523 = vmatpush1.msra.mxu0 %v457
        %524 = vmatprep.subr.mxu0 0.0
        %525 = vmatpush1.msra.mxu0 %v458
        %526 = vmatprep.subr.mxu0 0.0
        %527 = vmatpush1.msra.mxu0 %v459
        %528 = vmatprep.subr.mxu0 0.0
        %529 = vmatpush1.msra.mxu0 %v460
        %530 = vmatprep.subr.mxu0 0.0
        %531 = vmatpush1.msra.mxu0 %v461
        %532 = vmatprep.subr.mxu0 0.0
        %533 = vmatpush1.msra.mxu0 %v462
        %534 = vmatprep.subr.mxu0 0.0
        %535 = vmatpush1.msra.mxu0 %v463
        %536 = vmatprep.subr.mxu0 0.0
        %537 = vmatpush1.msra.mxu0 %v464
        %538 = vmatprep.subr.mxu0 0.0
        %539 = vmatpush1.msra.mxu0 %v465
        %540 = vmatprep.subr.mxu0 0.0
        %541 = vmatpush1.msra.mxu0 %v466
        %542 = vmatprep.subr.mxu0 0.0
        %543 = vmatpush1.msra.mxu0 %v467
        %544 = vmatprep.subr.mxu0 0.0
        %545 = vmatpush1.msra.mxu0 %v468
        %546 = vmatprep.subr.mxu0 0.0
        %547 = vmatpush1.msra.mxu0 %v469
        %548 = vmatprep.subr.mxu0 0.0
        %549 = vmatpush1.msra.mxu0 %v470
        %550 = vmatprep.subr.mxu0 0.0
        %551 = vmatpush1.msra.mxu0 %v471
        %552 = vmatprep.mubr.f32.mxu0 %v434
        %553 = vmatmul.mubr.f32.gmra.mrb[0].mxu0 %v431
        %v554 = vpop.f32.mrb[0].mxu0
        %v555 = vadd.f32 0.0, %v554
        %v556 = vpop.f32.mrb[0].mxu0
        %557 = vmatprep.mubr.f32.mxu0 %v435
        %558 = vmatmul.mubr.f32.gmra.mrb[0].mxu0 %v432
        %v559 = vpop.f32.mrb[0].mxu0
        %v560 = vadd.f32 0.0, %v559
        %v561 = vpop.f32.mrb[0].mxu0
        %562 = vmatprep.mubr.f32.mxu0 %v436
        %563 = vmatmul.mubr.f32.gmra.mrb[0].mxu0 %v433
        %v564 = vpop.f32.mrb[0].mxu0
        %v565 = vadd.f32 0.0, %v564
        %v566 = vpop.f32.mrb[0].mxu0
        %567 = vdwg.mxu0
        %568 = vmatprep.subr.mxu0 0.0
        %569 = vmatpush1.msra.mxu0 %v472
        %570 = vmatprep.subr.mxu0 0.0
        %571 = vmatpush1.msra.mxu0 %v473
        %572 = vmatprep.subr.mxu0 0.0
        %573 = vmatpush1.msra.mxu0 %v474
        %574 = vmatprep.subr.mxu0 0.0
        %575 = vmatpush1.msra.mxu0 %v475
        %576 = vmatprep.subr.mxu0 0.0
        %577 = vmatpush1.msra.mxu0 %v476
        %578 = vmatprep.subr.mxu0 0.0
        %579 = vmatpush1.msra.mxu0 %v477
        %580 = vmatprep.subr.mxu0 0.0
        %581 = vmatpush1.msra.mxu0 %v478
        %582 = vmatprep.subr.mxu0 0.0
        %583 = vmatpush1.msra.mxu0 %v479
        %584 = vmatprep.subr.mxu0 0.0
        %585 = vmatpush1.msra.mxu0 %v480
        %586 = vmatprep.subr.mxu0 0.0
        %587 = vmatpush1.msra.mxu0 %v481
        %588 = vmatprep.subr.mxu0 0.0
        %589 = vmatpush1.msra.mxu0 %v482
        %590 = vmatprep.subr.mxu0 0.0
        %591 = vmatpush1.msra.mxu0 %v483
        %592 = vmatprep.subr.mxu0 0.0
        %593 = vmatpush1.msra.mxu0 %v484
        %594 = vmatprep.subr.mxu0 0.0
        %595 = vmatpush1.msra.mxu0 %v485
        %596 = vmatprep.subr.mxu0 0.0
        %597 = vmatpush1.msra.mxu0 %v486
        %598 = vmatprep.subr.mxu0 0.0
        %599 = vmatpush1.msra.mxu0 %v487
        %600 = vmatprep.subr.mxu0 0.0
        %601 = vmatpush1.msra.mxu0 0.0
        %602 = vmatprep.subr.mxu0 0.0
        %603 = vmatpush1.msra.mxu0 0.0
        %604 = vmatprep.subr.mxu0 0.0
        %605 = vmatpush1.msra.mxu0 0.0
        %606 = vmatprep.subr.mxu0 0.0
        %607 = vmatpush1.msra.mxu0 0.0
        %608 = vmatprep.subr.mxu0 0.0
        %609 = vmatpush1.msra.mxu0 0.0
        %610 = vmatprep.subr.mxu0 0.0
        %611 = vmatpush1.msra.mxu0 0.0
        %612 = vmatprep.subr.mxu0 0.0
        %613 = vmatpush1.msra.mxu0 0.0
        %614 = vmatprep.subr.mxu0 0.0
        %615 = vmatpush1.msra.mxu0 0.0
        %616 = vmatprep.subr.mxu0 0.0
        %617 = vmatpush1.msra.mxu0 0.0
        %618 = vmatprep.subr.mxu0 0.0
        %619 = vmatpush1.msra.mxu0 0.0
        %620 = vmatprep.subr.mxu0 0.0
        %621 = vmatpush1.msra.mxu0 0.0
        %622 = vmatprep.subr.mxu0 0.0
        %623 = vmatpush1.msra.mxu0 0.0
        %624 = vmatprep.subr.mxu0 0.0
        %625 = vmatpush1.msra.mxu0 0.0
        %626 = vmatprep.subr.mxu0 0.0
        %627 = vmatpush1.msra.mxu0 0.0
        %628 = vmatprep.subr.mxu0 0.0
        %629 = vmatpush1.msra.mxu0 0.0
        %630 = vmatprep.subr.mxu0 0.0
        %631 = vmatpush1.msra.mxu0 0.0
        %632 = vmatprep.mubr.f32.mxu0 0.0
        %633 = vmatmul.mubr.f32.gmra.mrb[0].mxu0 %v437
        %v634 = vpop.f32.mrb[0].mxu0
        %v635 = vadd.f32 %v555, %v634
        %v636 = vpop.f32.mrb[0].mxu0
        %637 = vmatprep.mubr.f32.mxu0 0.0
        %638 = vmatmul.mubr.f32.gmra.mrb[0].mxu0 %v438
        %v639 = vpop.f32.mrb[0].mxu0
        %v640 = vadd.f32 %v560, %v639
        %v641 = vpop.f32.mrb[0].mxu0
        %642 = vmatprep.mubr.f32.mxu0 0.0
        %643 = vmatmul.mubr.f32.gmra.mrb[0].mxu0 %v439
        %v644 = vpop.f32.mrb[0].mxu0
        %v645 = vadd.f32 %v565, %v644
        %v646 = vpop.f32.mrb[0].mxu0
        %647 = vdwg.mxu0
        %v648 = vld [vmem:[%s2] sm:$0x1]
        %v650 = vlaneseq
        %v651 = vshrl.u32 %v650, 7
        %v652 = vsub.s32 0, %v651
        %v653 = vrot.slane %v648, %v652
        %v655 = vmul.f32 %v635, %v653
        %v656 = vmul.f32 %v640, %v653
        %v657 = vmul.f32 %v645, %v653
        %v658 = vld [vmem:[%s3] sm:$0x1]
        %v660 = vlaneseq
        %v661 = vshrl.u32 %v660, 7
        %v662 = vsub.s32 0, %v661
        %v663 = vrot.slane %v658, %v662
        %v665 = vadd.f32 %v655, %v663
        %v666 = vadd.f32 %v656, %v663
        %v667 = vadd.f32 %v657, %v663
        %v668 = vmax.f32 %v665, 0.0
        %v669 = vmax.f32 %v666, 0.0
        %v670 = vmax.f32 %v667, 0.0
        %s671 = smul.u32 %s31, 16
        %s672 = ssub.s32 %s671, 1
        %v673 = vlaneseq
        %v674 = vshrl.u32 %v673, 7
        %v675 = vadd.s32 %v674, 8
        %v676 = vadd.s32 %v674, 16
        %v677 = vstv %s672
        %v678 = vadd.s32 %v677, %v674
        %v679 = vadd.s32 %v677, %v675
        %v680 = vadd.s32 %v677, %v676
        %vm681 = vcmp.ge.s32.totalorder %v678, 0
        %vm682 = vcmp.ge.s32.totalorder %v679, 0
        %vm683 = vcmp.ge.s32.totalorder %v680, 0
        %vm684 = vcmp.lt.s32.totalorder %v678, 16
        %vm685 = vcmp.lt.s32.totalorder %v679, 16
        %vm686 = vcmp.lt.s32.totalorder %v680, 16
        %vm687 = vmand %vm681, %vm684
        %vm688 = vmand %vm682, %vm685
        %vm689 = vmand %vm683, %vm686
        %v690 = vsel %vm687, 1, 0
        %v691 = vsel %vm688, 1, 0
        %v692 = vsel %vm689, 1, 0
        %vm693 = vcmp.eq.s32.totalorder %v690, 1
        %vm694 = vcmp.eq.s32.totalorder %v691, 1
        %vm695 = vcmp.eq.s32.totalorder %v692, 1
        %v696 = vsel %vm693, %v668, 0.0
        %v697 = vsel %vm694, %v669, 0.0
        %v698 = vsel %vm695, %v670, 0.0
        %699 = vst [vmem:[#allocation2] sm:$0xff] %v696
        %700 = vst [vmem:[#allocation2 + $0x8] sm:$0xff] %v697
        %701 = vst [vmem:[#allocation2 + $0x10] sm:$0x3] %v698
        %v702 = vld [vmem:[#allocation2] sm:$0xff]
        %v703 = vld [vmem:[#allocation2 + $0x8] sm:$0xff]
        %v704 = vld [vmem:[#allocation2 + $0x1] sm:$0xff]
        %v705 = vld [vmem:[#allocation2 + $0x9] sm:$0xff]
        %v706 = vld [vmem:[#allocation2 + $0x2] sm:$0xff]
        %v707 = vld [vmem:[#allocation2 + $0xa] sm:$0xff]
        %v708 = vld [vmem:[#allocation6] sm:$0xff]
        %v709 = vld [vmem:[#allocation6 + $0x8] sm:$0xff]
        %v710 = vld [vmem:[#allocation6 + $0x10] sm:$0xff]
        %v711 = vld [vmem:[#allocation6 + $0x18] sm:$0xff]
        %v712 = vld [vmem:[#allocation6 + $0x20] sm:$0xff]
        %v713 = vld [vmem:[#allocation6 + $0x28] sm:$0xff]
        %v714 = vld [vmem:[#allocation6 + $0x30] sm:$0xff]
        %v715 = vld [vmem:[#allocation6 + $0x38] sm:$0xff]
        %v716 = vld [vmem:[#allocation6 + $0x40] sm:$0xff]
        %v717 = vld [vmem:[#allocation6 + $0x48] sm:$0xff]
        %v718 = vld [vmem:[#allocation6 + $0x50] sm:$0xff]
        %v719 = vld [vmem:[#allocation6 + $0x58] sm:$0xff]
        %v720 = vld [vmem:[#allocation6 + $0x60] sm:$0xff]
        %v721 = vld [vmem:[#allocation6 + $0x68] sm:$0xff]
        %v722 = vld [vmem:[#allocation6 + $0x70] sm:$0xff]
        %v723 = vld [vmem:[#allocation6 + $0x78] sm:$0xff]
        %v724 = vld [vmem:[#allocation6 + $0x80] sm:$0xff]
        %v725 = vld [vmem:[#allocation6 + $0x88] sm:$0xff]
        %v726 = vld [vmem:[#allocation6 + $0x90] sm:$0xff]
        %v727 = vld [vmem:[#allocation6 + $0x98] sm:$0xff]
        %v728 = vld [vmem:[#allocation6 + $0xa0] sm:$0xff]
        %v729 = vld [vmem:[#allocation6 + $0xa8] sm:$0xff]
        %v730 = vld [vmem:[#allocation6 + $0xb0] sm:$0xff]
        %v731 = vld [vmem:[#allocation6 + $0xb8] sm:$0xff]
        %v732 = vld [vmem:[#allocation6 + $0xc0] sm:$0xff]
        %v733 = vld [vmem:[#allocation6 + $0xc8] sm:$0xff]
        %v734 = vld [vmem:[#allocation6 + $0xd0] sm:$0xff]
        %v735 = vld [vmem:[#allocation6 + $0xd8] sm:$0xff]
        %v736 = vld [vmem:[#allocation6 + $0xe0] sm:$0xff]
        %v737 = vld [vmem:[#allocation6 + $0xe8] sm:$0xff]
        %v738 = vld [vmem:[#allocation6 + $0xf0] sm:$0xff]
        %v739 = vld [vmem:[#allocation6 + $0xf8] sm:$0xff]
        %v740 = vld [vmem:[#allocation6 + $0x100] sm:$0xff]
        %v741 = vld [vmem:[#allocation6 + $0x108] sm:$0xff]
        %v742 = vld [vmem:[#allocation6 + $0x110] sm:$0xff]
        %v743 = vld [vmem:[#allocation6 + $0x118] sm:$0xff]
        %v744 = vld [vmem:[#allocation6 + $0x120] sm:$0xff]
        %v745 = vld [vmem:[#allocation6 + $0x128] sm:$0xff]
        %v746 = vld [vmem:[#allocation6 + $0x130] sm:$0xff]
        %v747 = vld [vmem:[#allocation6 + $0x138] sm:$0xff]
        %v748 = vld [vmem:[#allocation6 + $0x140] sm:$0xff]
        %v749 = vld [vmem:[#allocation6 + $0x148] sm:$0xff]
        %v750 = vld [vmem:[#allocation6 + $0x150] sm:$0xff]
        %v751 = vld [vmem:[#allocation6 + $0x158] sm:$0xff]
        %v752 = vld [vmem:[#allocation6 + $0x160] sm:$0xff]
        %v753 = vld [vmem:[#allocation6 + $0x168] sm:$0xff]
        %v754 = vld [vmem:[#allocation6 + $0x170] sm:$0xff]
        %v755 = vld [vmem:[#allocation6 + $0x178] sm:$0xff]
        %756 = vmatprep.subr.mxu0 0.0
        %757 = vmatpush1.msra.mxu0 %v708
        %758 = vmatprep.subr.mxu0 0.0
        %759 = vmatpush1.msra.mxu0 %v709
        %760 = vmatprep.subr.mxu0 0.0
        %761 = vmatpush1.msra.mxu0 %v710
        %762 = vmatprep.subr.mxu0 0.0
        %763 = vmatpush1.msra.mxu0 %v711
        %764 = vmatprep.subr.mxu0 0.0
        %765 = vmatpush1.msra.mxu0 %v712
        %766 = vmatprep.subr.mxu0 0.0
        %767 = vmatpush1.msra.mxu0 %v713
        %768 = vmatprep.subr.mxu0 0.0
        %769 = vmatpush1.msra.mxu0 %v714
        %770 = vmatprep.subr.mxu0 0.0
        %771 = vmatpush1.msra.mxu0 %v715
        %772 = vmatprep.subr.mxu0 0.0
        %773 = vmatpush1.msra.mxu0 %v716
        %774 = vmatprep.subr.mxu0 0.0
        %775 = vmatpush1.msra.mxu0 %v717
        %776 = vmatprep.subr.mxu0 0.0
        %777 = vmatpush1.msra.mxu0 %v718
        %778 = vmatprep.subr.mxu0 0.0
        %779 = vmatpush1.msra.mxu0 %v719
        %780 = vmatprep.subr.mxu0 0.0
        %781 = vmatpush1.msra.mxu0 %v720
        %782 = vmatprep.subr.mxu0 0.0
        %783 = vmatpush1.msra.mxu0 %v721
        %784 = vmatprep.subr.mxu0 0.0
        %785 = vmatpush1.msra.mxu0 %v722
        %786 = vmatprep.subr.mxu0 0.0
        %787 = vmatpush1.msra.mxu0 %v723
        %788 = vmatprep.subr.mxu0 0.0
        %789 = vmatpush1.msra.mxu0 %v724
        %790 = vmatprep.subr.mxu0 0.0
        %791 = vmatpush1.msra.mxu0 %v725
        %792 = vmatprep.subr.mxu0 0.0
        %793 = vmatpush1.msra.mxu0 %v726
        %794 = vmatprep.subr.mxu0 0.0
        %795 = vmatpush1.msra.mxu0 %v727
        %796 = vmatprep.subr.mxu0 0.0
        %797 = vmatpush1.msra.mxu0 %v728
        %798 = vmatprep.subr.mxu0 0.0
        %799 = vmatpush1.msra.mxu0 %v729
        %800 = vmatprep.subr.mxu0 0.0
        %801 = vmatpush1.msra.mxu0 %v730
        %802 = vmatprep.subr.mxu0 0.0
        %803 = vmatpush1.msra.mxu0 %v731
        %804 = vmatprep.subr.mxu0 0.0
        %805 = vmatpush1.msra.mxu0 %v732
        %806 = vmatprep.subr.mxu0 0.0
        %807 = vmatpush1.msra.mxu0 %v733
        %808 = vmatprep.subr.mxu0 0.0
        %809 = vmatpush1.msra.mxu0 %v734
        %810 = vmatprep.subr.mxu0 0.0
        %811 = vmatpush1.msra.mxu0 %v735
        %812 = vmatprep.subr.mxu0 0.0
        %813 = vmatpush1.msra.mxu0 %v736
        %814 = vmatprep.subr.mxu0 0.0
        %815 = vmatpush1.msra.mxu0 %v737
        %816 = vmatprep.subr.mxu0 0.0
        %817 = vmatpush1.msra.mxu0 %v738
        %818 = vmatprep.subr.mxu0 0.0
        %819 = vmatpush1.msra.mxu0 %v739
        %820 = vmatprep.mubr.f32.mxu0 %v704
        %821 = vmatmul.mubr.f32.gmra.mrb[0].mxu0 %v702
        %v822 = vpop.f32.mrb[0].mxu0
        %v823 = vadd.f32 0.0, %v822
        %v824 = vpop.f32.mrb[0].mxu0
        %825 = vmatprep.mubr.f32.mxu0 %v705
        %826 = vmatmul.mubr.f32.gmra.mrb[0].mxu0 %v703
        %v827 = vpop.f32.mrb[0].mxu0
        %v828 = vadd.f32 0.0, %v827
        %v829 = vpop.f32.mrb[0].mxu0
        %830 = vdwg.mxu0
        %831 = vmatprep.subr.mxu0 0.0
        %832 = vmatpush1.msra.mxu0 %v740
        %833 = vmatprep.subr.mxu0 0.0
        %834 = vmatpush1.msra.mxu0 %v741
        %835 = vmatprep.subr.mxu0 0.0
        %836 = vmatpush1.msra.mxu0 %v742
        %837 = vmatprep.subr.mxu0 0.0
        %838 = vmatpush1.msra.mxu0 %v743
        %839 = vmatprep.subr.mxu0 0.0
        %840 = vmatpush1.msra.mxu0 %v744
        %841 = vmatprep.subr.mxu0 0.0
        %842 = vmatpush1.msra.mxu0 %v745
        %843 = vmatprep.subr.mxu0 0.0
        %844 = vmatpush1.msra.mxu0 %v746
        %845 = vmatprep.subr.mxu0 0.0
        %846 = vmatpush1.msra.mxu0 %v747
        %847 = vmatprep.subr.mxu0 0.0
        %848 = vmatpush1.msra.mxu0 %v748
        %849 = vmatprep.subr.mxu0 0.0
        %850 = vmatpush1.msra.mxu0 %v749
        %851 = vmatprep.subr.mxu0 0.0
        %852 = vmatpush1.msra.mxu0 %v750
        %853 = vmatprep.subr.mxu0 0.0
        %854 = vmatpush1.msra.mxu0 %v751
        %855 = vmatprep.subr.mxu0 0.0
        %856 = vmatpush1.msra.mxu0 %v752
        %857 = vmatprep.subr.mxu0 0.0
        %858 = vmatpush1.msra.mxu0 %v753
        %859 = vmatprep.subr.mxu0 0.0
        %860 = vmatpush1.msra.mxu0 %v754
        %861 = vmatprep.subr.mxu0 0.0
        %862 = vmatpush1.msra.mxu0 %v755
        %863 = vmatprep.subr.mxu0 0.0
        %864 = vmatpush1.msra.mxu0 0.0
        %865 = vmatprep.subr.mxu0 0.0
        %866 = vmatpush1.msra.mxu0 0.0
        %867 = vmatprep.subr.mxu0 0.0
        %868 = vmatpush1.msra.mxu0 0.0
        %869 = vmatprep.subr.mxu0 0.0
        %870 = vmatpush1.msra.mxu0 0.0
        %871 = vmatprep.subr.mxu0 0.0
        %872 = vmatpush1.msra.mxu0 0.0
        %873 = vmatprep.subr.mxu0 0.0
        %874 = vmatpush1.msra.mxu0 0.0
        %875 = vmatprep.subr.mxu0 0.0
        %876 = vmatpush1.msra.mxu0 0.0
        %877 = vmatprep.subr.mxu0 0.0
        %878 = vmatpush1.msra.mxu0 0.0
        %879 = vmatprep.subr.mxu0 0.0
        %880 = vmatpush1.msra.mxu0 0.0
        %881 = vmatprep.subr.mxu0 0.0
        %882 = vmatpush1.msra.mxu0 0.0
        %883 = vmatprep.subr.mxu0 0.0
        %884 = vmatpush1.msra.mxu0 0.0
        %885 = vmatprep.subr.mxu0 0.0
        %886 = vmatpush1.msra.mxu0 0.0
        %887 = vmatprep.subr.mxu0 0.0
        %888 = vmatpush1.msra.mxu0 0.0
        %889 = vmatprep.subr.mxu0 0.0
        %890 = vmatpush1.msra.mxu0 0.0
        %891 = vmatprep.subr.mxu0 0.0
        %892 = vmatpush1.msra.mxu0 0.0
        %893 = vmatprep.subr.mxu0 0.0
        %894 = vmatpush1.msra.mxu0 0.0
        %895 = vmatprep.mubr.f32.mxu0 0.0
        %896 = vmatmul.mubr.f32.gmra.mrb[0].mxu0 %v706
        %v897 = vpop.f32.mrb[0].mxu0
        %v898 = vadd.f32 %v823, %v897
        %v899 = vpop.f32.mrb[0].mxu0
        %900 = vmatprep.mubr.f32.mxu0 0.0
        %901 = vmatmul.mubr.f32.gmra.mrb[0].mxu0 %v707
        %v902 = vpop.f32.mrb[0].mxu0
        %v903 = vadd.f32 %v828, %v902
        %v904 = vpop.f32.mrb[0].mxu0
        %905 = vdwg.mxu0
        %v906 = vld [vmem:[%s5] sm:$0x1]
        %v908 = vlaneseq
        %v909 = vshrl.u32 %v908, 7
        %v910 = vsub.s32 0, %v909
        %v911 = vrot.slane %v906, %v910
        %v913 = vmul.f32 %v898, %v911
        %v914 = vmul.f32 %v903, %v911
        %v915 = vld [vmem:[%s6] sm:$0x1]
        %v917 = vlaneseq
        %v918 = vshrl.u32 %v917, 7
        %v919 = vsub.s32 0, %v918
        %v920 = vrot.slane %v915, %v919
        %v922 = vadd.f32 %v913, %v920
        %v923 = vadd.f32 %v914, %v920
        %v924 = vld [vmem:[%s429 + $0x2] sm:$0xff]
        %v925 = vld [vmem:[%s429 + $0xa] sm:$0xff]
        %v926 = vld [vmem:[#allocation8] sm:$0xff]
        %v927 = vld [vmem:[#allocation8 + $0x8] sm:$0xff]
        %v928 = vld [vmem:[#allocation8 + $0x10] sm:$0xff]
        %v929 = vld [vmem:[#allocation8 + $0x18] sm:$0xff]
        %v930 = vld [vmem:[#allocation8 + $0x20] sm:$0xff]
        %v931 = vld [vmem:[#allocation8 + $0x28] sm:$0xff]
        %v932 = vld [vmem:[#allocation8 + $0x30] sm:$0xff]
        %v933 = vld [vmem:[#allocation8 + $0x38] sm:$0xff]
        %v934 = vld [vmem:[#allocation8 + $0x40] sm:$0xff]
        %v935 = vld [vmem:[#allocation8 + $0x48] sm:$0xff]
        %v936 = vld [vmem:[#allocation8 + $0x50] sm:$0xff]
        %v937 = vld [vmem:[#allocation8 + $0x58] sm:$0xff]
        %v938 = vld [vmem:[#allocation8 + $0x60] sm:$0xff]
        %v939 = vld [vmem:[#allocation8 + $0x68] sm:$0xff]
        %v940 = vld [vmem:[#allocation8 + $0x70] sm:$0xff]
        %v941 = vld [vmem:[#allocation8 + $0x78] sm:$0xff]
        %942 = vmatprep.subr.mxu0 0.0
        %943 = vmatpush1.msra.mxu0 %v926
        %944 = vmatprep.subr.mxu0 0.0
        %945 = vmatpush1.msra.mxu0 %v927
        %946 = vmatprep.subr.mxu0 0.0
        %947 = vmatpush1.msra.mxu0 %v928
        %948 = vmatprep.subr.mxu0 0.0
        %949 = vmatpush1.msra.mxu0 %v929
        %950 = vmatprep.subr.mxu0 0.0
        %951 = vmatpush1.msra.mxu0 %v930
        %952 = vmatprep.subr.mxu0 0.0
        %953 = vmatpush1.msra.mxu0 %v931
        %954 = vmatprep.subr.mxu0 0.0
        %955 = vmatpush1.msra.mxu0 %v932
        %956 = vmatprep.subr.mxu0 0.0
        %957 = vmatpush1.msra.mxu0 %v933
        %958 = vmatprep.subr.mxu0 0.0
        %959 = vmatpush1.msra.mxu0 %v934
        %960 = vmatprep.subr.mxu0 0.0
        %961 = vmatpush1.msra.mxu0 %v935
        %962 = vmatprep.subr.mxu0 0.0
        %963 = vmatpush1.msra.mxu0 %v936
        %964 = vmatprep.subr.mxu0 0.0
        %965 = vmatpush1.msra.mxu0 %v937
        %966 = vmatprep.subr.mxu0 0.0
        %967 = vmatpush1.msra.mxu0 %v938
        %968 = vmatprep.subr.mxu0 0.0
        %969 = vmatpush1.msra.mxu0 %v939
        %970 = vmatprep.subr.mxu0 0.0
        %971 = vmatpush1.msra.mxu0 %v940
        %972 = vmatprep.subr.mxu0 0.0
        %973 = vmatpush1.msra.mxu0 %v941
        %974 = vmatprep.subr.mxu0 0.0
        %975 = vmatpush1.msra.mxu0 0.0
        %976 = vmatprep.subr.mxu0 0.0
        %977 = vmatpush1.msra.mxu0 0.0
        %978 = vmatprep.subr.mxu0 0.0
        %979 = vmatpush1.msra.mxu0 0.0
        %980 = vmatprep.subr.mxu0 0.0
        %981 = vmatpush1.msra.mxu0 0.0
        %982 = vmatprep.subr.mxu0 0.0
        %983 = vmatpush1.msra.mxu0 0.0
        %984 = vmatprep.subr.mxu0 0.0
        %985 = vmatpush1.msra.mxu0 0.0
        %986 = vmatprep.subr.mxu0 0.0
        %987 = vmatpush1.msra.mxu0 0.0
        %988 = vmatprep.subr.mxu0 0.0
        %989 = vmatpush1.msra.mxu0 0.0
        %990 = vmatprep.subr.mxu0 0.0
        %991 = vmatpush1.msra.mxu0 0.0
        %992 = vmatprep.subr.mxu0 0.0
        %993 = vmatpush1.msra.mxu0 0.0
        %994 = vmatprep.subr.mxu0 0.0
        %995 = vmatpush1.msra.mxu0 0.0
        %996 = vmatprep.subr.mxu0 0.0
        %997 = vmatpush1.msra.mxu0 0.0
        %998 = vmatprep.subr.mxu0 0.0
        %999 = vmatpush1.msra.mxu0 0.0
        %1000 = vmatprep.subr.mxu0 0.0
        %1001 = vmatpush1.msra.mxu0 0.0
        %1002 = vmatprep.subr.mxu0 0.0
        %1003 = vmatpush1.msra.mxu0 0.0
        %1004 = vmatprep.subr.mxu0 0.0
        %1005 = vmatpush1.msra.mxu0 0.0
        %1006 = vmatprep.mubr.f32.mxu0 0.0
        %1007 = vmatmul.mubr.f32.gmra.mrb[0].mxu0 %v924
        %v1008 = vpop.f32.mrb[0].mxu0
        %v1009 = vadd.f32 0.0, %v1008
        %v1010 = vpop.f32.mrb[0].mxu0
        %1011 = vmatprep.mubr.f32.mxu0 0.0
        %1012 = vmatmul.mubr.f32.gmra.mrb[0].mxu0 %v925
        %v1013 = vpop.f32.mrb[0].mxu0
        %v1014 = vadd.f32 0.0, %v1013
        %v1015 = vpop.f32.mrb[0].mxu0
        %1016 = vdwg.mxu0
        %v1017 = vld [vmem:[%s8] sm:$0x1]
        %v1019 = vlaneseq
        %v1020 = vshrl.u32 %v1019, 7
        %v1021 = vsub.s32 0, %v1020
        %v1022 = vrot.slane %v1017, %v1021
        %v1024 = vmul.f32 %v1009, %v1022
        %v1025 = vmul.f32 %v1014, %v1022
        %v1026 = vld [vmem:[%s9] sm:$0x1]
        %v1028 = vlaneseq
        %v1029 = vshrl.u32 %v1028, 7
        %v1030 = vsub.s32 0, %v1029
        %v1031 = vrot.slane %v1026, %v1030
        %v1033 = vadd.f32 %v1024, %v1031
        %v1034 = vadd.f32 %v1025, %v1031
        %v1035 = vadd.f32 %v922, %v1033
        %v1036 = vadd.f32 %v923, %v1034
        %v1037 = vmax.f32 %v1035, 0.0
        %v1038 = vmax.f32 %v1036, 0.0
        %1039 = vst [vmem:[%s420] sm:$0xff] %v1037
        %1040 = vst [vmem:[%s420 + $0x8] sm:$0xff] %v1038
        %s1041 = sand.u32 %s265, 1
        %s1042 = scalar_lea.sflag [#allocation5], %s1041
        %s1043 = sand.u32 %s265, 1
        %s1044 = smul.addr %s1043, 16
        %s1045 = scalar_lea.vmem [#allocation9], %s1044
        // Predicated region
        $region73: #{tpu_custom_call.1} parent=59 // pred_check
          %p1046 = pneg %p275
        $region74: #{tpu_custom_call.1} parent=59 // pred_check_branch
          %1048 = sbr.rel (%p1046) target = $region76
        $region75: #{tpu_custom_call.1} parent=59 // pred_region
          %s1049 = smul.u32 2, %s31
          %s1051 = ssub.s32 256, 256
          %1052 = vsyncadd %s1042, %s1051
          %s1053 = smul.addr %s30, 2
          %s1054 = sadd.s32 %s1049, %s1053
          %s1055 = smul.addr %s1054, 128
          %s1056 = scalar_lea.hbm %s10, %s1055
          %s1057 = sshll.u32 %s1045, 4
          %s1058 = int_to_ptr.vmem [resolvable:$true] %s1057
          %1063 = dma.vmem_to_hbm [thread:$0]  %s1058, 256, %s1056, %s1042, 128, 128, 8
        $region76: #{tpu_custom_call.1} parent=59 // pred_fallthru
          _
      $region60: #{tpu_custom_call.1} parent=5 // pred_fallthru
        _
      %p1064 = scmp.le.s32.totalorder 2, %s21
      // Predicated region
      $region77: #{tpu_custom_call.1} parent=5 // pred_check
        %p1065 = pneg %p1064
      $region78: #{tpu_custom_call.1} parent=5 // pred_check_branch
        %1067 = sbr.rel (%p1065) target = $region80
      $region79: #{tpu_custom_call.1} parent=5 // pred_region
        %s1068 = ssub.s32 %s21, 2
        // Predicated region
        $region81: #{tpu_custom_call.1} parent=79 // pred_check
          %p1069 = pneg %p281
        $region82: #{tpu_custom_call.1} parent=79 // pred_check_branch
          %1071 = sbr.rel (%p1069) target = $region84
        $region83: #{tpu_custom_call.1} parent=79 // pred_region
          %s1072 = sand.u32 %s266, 1
          %s1073 = scalar_lea.sflag [#allocation5], %s1072
          %s1074 = sand.u32 %s266, 1
          %s1075 = smul.addr %s1074, 16
          %s1076 = scalar_lea.vmem [#allocation9], %s1075
          %1077 = dma.done %s1073, 256
        $region84: #{tpu_custom_call.1} parent=79 // pred_fallthru
          _
      $region80: #{tpu_custom_call.1} parent=5 // pred_fallthru
        _
    $region6: #{tpu_custom_call.1} parent=1 // loop_footer
      %s25 = sadd.s32 1, %s21
    $region7: #{tpu_custom_call.1} parent=1 // loop_footer_branch
      %20 = sbr.rel target = $region3
    $region8: #{tpu_custom_call.1} parent=1 // loop_exit
      _
    %1078 = vsyncpa [#allocation4], 1
    %s1079 = scalar_lea.sflag [#allocation4], 1
    %1080 = vsyncpa %s1079, 1
    %1081 = vsyncpa [#allocation7], 1
    %1082 = vsyncpa [#allocation5], 1
    %s1083 = scalar_lea.sflag [#allocation5], 1
    %1084 = vsyncpa %s1083, 1

// kernel: tpu_custom_call.1
$region0: #{tpu_custom_call.1}
  #allocation0 [shape = 'u32[]', space=smem, size = 0x4, offset = 0x4, fixed_abs, tag = 'smem constant byte address 0x4 - core index']
  #allocation1 [shape = 'u32[144,128]{1,0:T(1,128)}', space=vmem, size = 0x12000, scoped, tag = 'internal scratch']
  #allocation2 [shape = 'f32[18,128]{1,0:T(8,128)}', space=vmem, size = 0x3000, scoped, tag = 'scratch operand']
  %s0 = inlined_call_operand.vmem [shape: f32[2,1,1,20,128], index: 0, kind: input, shape index: {}]
  %s1 = inlined_call_operand.hbm [shape: f32[384,128], index: 1, kind: input, shape index: {}]
  %s2 = inlined_call_operand.vmem [shape: f32[1,128], index: 2, kind: input, shape index: {}]
  %s3 = inlined_call_operand.vmem [shape: f32[1,128], index: 3, kind: input, shape index: {}]
  %s4 = inlined_call_operand.hbm [shape: f32[384,128], index: 4, kind: input, shape index: {}]
  %s5 = inlined_call_operand.vmem [shape: f32[1,128], index: 5, kind: input, shape index: {}]
  %s6 = inlined_call_operand.vmem [shape: f32[1,128], index: 6, kind: input, shape index: {}]
  %s7 = inlined_call_operand.hbm [shape: f32[128,128], index: 7, kind: input, shape index: {}]
  %s8 = inlined_call_operand.vmem [shape: f32[1,128], index: 8, kind: input, shape index: {}]
  %s9 = inlined_call_operand.vmem [shape: f32[1,128], index: 9, kind: input, shape index: {}]
  %s10 = inlined_call_operand.hbm [shape: f32[2,16,128], index: 10, kind: output, shape index: {}]
  %s11 = sld [smem:[#allocation0]]
  $region85: #{tpu_custom_call.1} parent=0
    _
  %s13 = ssub.s32 1, %s11
  %s14 = scalar_select 0, %s13, %s11
  $region1: #{tpu_custom_call.1} parent=0
    #allocation3 [shape = 'u8[196608]{0}', space=vmem, size = 0x30000, scoped, tag = 'input window, operand 1, single buffered']
    #allocation4 [shape = 's32[2]{0}', space=sflag, size = 0x8, scoped, tag = 'scoped memory for tpu_custom_call.1']
    #allocation5 [shape = 's32[2]{0}', space=sflag, size = 0x8, scoped, tag = 'scoped memory for tpu_custom_call.1']
    #allocation6 [shape = 'u8[196608]{0}', space=vmem, size = 0x30000, scoped, tag = 'input window, operand 4, single buffered']
    #allocation7 [shape = 's32[1]{0}', space=sflag, size = 0x4, scoped, tag = 'scoped memory for tpu_custom_call.1']
    #allocation8 [shape = 'u8[65536]{0}', space=vmem, size = 0x10000, scoped, tag = 'input window, operand 7, single buffered']
    #allocation9 [shape = 'u8[16384]{0}', space=vmem, size = 0x4000, scoped, tag = 'output window, operand 0']
    %15 = vsyncpa [#allocation4], 0
    %16 = vsyncpa [#allocation7], 0
    %17 = vsyncpa [#allocation5], 0
    %s18 = scalar_lea.sflag [#allocation5], 1
    %19 = vsyncpa %s18, 0
    loop: start=0, step=1, limit=4
    $region2: #{tpu_custom_call.1} parent=1 // loop_pre_header
      _
    $region3: #{tpu_custom_call.1} parent=1 // loop_header
      %s21 = sphi 0, %s25
      %p22 = scmp.ge.s32.totalorder %s21, 4
      %s28 = sphi 0, %s40
      %s29 = sphi 0, %s36
      %s30 = sphi 0, %s28
      %s31 = sphi 0, %s29
      %s32 = sphi 0, %s30
      %s33 = sphi 0, %s31
      %s45 = sphi 0, %s47
      %s48 = sphi 0, %s45
      %s49 = sphi 0, %s48
      %s65 = sphi 0, %s49
      %s69 = sphi 0, %s69
      %s71 = sphi 0, %s69
      %s72 = sphi 0, %s71
      %s86 = sphi 0, %s72
      %s90 = sphi 0, %s90
      %s92 = sphi 0, %s90
      %s93 = sphi 0, %s92
      %s107 = sphi 0, %s93
      %s111 = sphi 0, %s111
      %s113 = sphi 0, %s111
      %s114 = sphi 0, %s113
      %s128 = sphi 0, %s114
      %s132 = sphi 0, %s132
      %s134 = sphi 0, %s132
      %s135 = sphi 0, %s134
      %s149 = sphi 0, %s135
      %s153 = sphi 0, %s153
      %s155 = sphi 0, %s153
      %s156 = sphi 0, %s155
      %s170 = sphi 0, %s156
      %s174 = sphi 0, %s174
      %s176 = sphi 0, %s174
      %s177 = sphi 0, %s176
      %s191 = sphi 0, %s177
      %s195 = sphi 0, %s195
      %s197 = sphi 0, %s195
      %s198 = sphi 0, %s197
      %s212 = sphi 0, %s198
      %s216 = sphi 0, %s216
      %s218 = sphi 0, %s216
      %s219 = sphi 0, %s218
      %s233 = sphi 0, %s219
      %s237 = sphi 0, %s237
      %s239 = sphi 0, %s237
      %s240 = sphi 0, %s239
      %s254 = sphi 0, %s240
      %s262 = sphi 0, %s264
      %s265 = sphi 0, %s262
      %s266 = sphi 0, %s265
      %s282 = sphi 0, %s266
    $region4: #{tpu_custom_call.1} parent=1 // loop_header_branch
      %24 = sbr.rel (%p22) target = $region8
    $region5: #{tpu_custom_call.1} parent=1 // loop_body
      %s26 = ssub.s32 %s21, 1
      %s27 = ssub.s32 %s21, 2
      %s34 = sadd.s32 1, %s29
      %p35 = scmp.ge.s32.totalorder %s34, 1
      %s36 = scalar_select %p35, 0, %s34
      %s37 = sadd.s32 1, %s28
      %s38 = scalar_select %p35, %s37, %s28
      %p39 = scmp.ge.s32.totalorder %s38, 2
      %s40 = scalar_select %p39, 0, %s38
      %s41 = ssub.s32 %s28, %s40
      %s42 = ssub.s32 %s29, %s36
      %s43 = sor.u32 %s41, %s42
      %p44 = scmp.eq.s32.totalorder %s43, 0
      %s46 = sadd.s32 %s45, 1
      %s47 = scalar_select %p44, %s45, %s46
      %p50 = pneg %p44
      %p51 = scmp.eq.s32.totalorder %s21, 1
      %p52 = por %p50, %p51
      %p53 = scmp.ne.s32.totalorder %s45, %s48
      %p54 = scmp.eq.s32.totalorder %s21, 0
      %p55 = por %p53, %p54
      %p56 = scmp.ne.s32.totalorder %s45, %s48
      %p57 = scmp.eq.s32.totalorder %s26, 1
      %p58 = por %p56, %p57
      %p59 = scmp.ne.s32.totalorder %s48, %s49
      %p60 = scmp.eq.s32.totalorder %s26, 0
      %p61 = por %p59, %p60
      %p62 = scmp.ne.s32.totalorder %s48, %s49
      %p63 = scmp.eq.s32.totalorder %s27, 1
      %p64 = por %p62, %p63
      %p66 = scmp.ne.s32.totalorder %s49, %s65
      %p67 = scmp.eq.s32.totalorder %s27, 0
      %p68 = por %p66, %p67
      %s70 = sadd.s32 %s69, 1
      %p73 = scmp.eq.s32.totalorder %s21, 1
      %p74 = scmp.ne.s32.totalorder %s69, %s71
      %p75 = scmp.eq.s32.totalorder %s21, 0
      %p76 = por %p74, %p75
      %p77 = scmp.ne.s32.totalorder %s69, %s71
      %p78 = scmp.eq.s32.totalorder %s26, 1
      %p79 = por %p77, %p78
      %p80 = scmp.ne.s32.totalorder %s71, %s72
      %p81 = scmp.eq.s32.totalorder %s26, 0
      %p82 = por %p80, %p81
      %p83 = scmp.ne.s32.totalorder %s71, %s72
      %p84 = scmp.eq.s32.totalorder %s27, 1
      %p85 = por %p83, %p84
      %p87 = scmp.ne.s32.totalorder %s72, %s86
      %p88 = scmp.eq.s32.totalorder %s27, 0
      %p89 = por %p87, %p88
      %s91 = sadd.s32 %s90, 1
      %p94 = scmp.eq.s32.totalorder %s21, 1
      %p95 = scmp.ne.s32.totalorder %s90, %s92
      %p96 = scmp.eq.s32.totalorder %s21, 0
      %p97 = por %p95, %p96
      %p98 = scmp.ne.s32.totalorder %s90, %s92
      %p99 = scmp.eq.s32.totalorder %s26, 1
      %p100 = por %p98, %p99
      %p101 = scmp.ne.s32.totalorder %s92, %s93
      %p102 = scmp.eq.s32.totalorder %s26, 0
      %p103 = por %p101, %p102
      %p104 = scmp.ne.s32.totalorder %s92, %s93
      %p105 = scmp.eq.s32.totalorder %s27, 1
      %p106 = por %p104, %p105
      %p108 = scmp.ne.s32.totalorder %s93, %s107
      %p109 = scmp.eq.s32.totalorder %s27, 0
      %p110 = por %p108, %p109
      %s112 = sadd.s32 %s111, 1
      %p115 = scmp.eq.s32.totalorder %s21, 1
      %p116 = scmp.ne.s32.totalorder %s111, %s113
      %p117 = scmp.eq.s32.totalorder %s21, 0
      %p118 = por %p116, %p117
      %p119 = scmp.ne.s32.totalorder %s111, %s113
      %p120 = scmp.eq.s32.totalorder %s26, 1
      %p121 = por %p119, %p120
      %p122 = scmp.ne.s32.totalorder %s113, %s114
      %p123 = scmp.eq.s32.totalorder %s26, 0
      %p124 = por %p122, %p123
      %p125 = scmp.ne.s32.totalorder %s113, %s114
      %p126 = scmp.eq.s32.totalorder %s27, 1
      %p127 = por %p125, %p126
      %p129 = scmp.ne.s32.totalorder %s114, %s128
      %p130 = scmp.eq.s32.totalorder %s27, 0
      %p131 = por %p129, %p130
      %s133 = sadd.s32 %s132, 1
      %p136 = scmp.eq.s32.totalorder %s21, 1
      %p137 = scmp.ne.s32.totalorder %s132, %s134
      %p138 = scmp.eq.s32.totalorder %s21, 0
      %p139 = por %p137, %p138
      %p140 = scmp.ne.s32.totalorder %s132, %s134
      %p141 = scmp.eq.s32.totalorder %s26, 1
      %p142 = por %p140, %p141
      %p143 = scmp.ne.s32.totalorder %s134, %s135
      %p144 = scmp.eq.s32.totalorder %s26, 0
      %p145 = por %p143, %p144
      %p146 = scmp.ne.s32.totalorder %s134, %s135
      %p147 = scmp.eq.s32.totalorder %s27, 1
      %p148 = por %p146, %p147
      %p150 = scmp.ne.s32.totalorder %s135, %s149
      %p151 = scmp.eq.s32.totalorder %s27, 0
      %p152 = por %p150, %p151
      %s154 = sadd.s32 %s153, 1
      %p157 = scmp.eq.s32.totalorder %s21, 1
      %p158 = scmp.ne.s32.totalorder %s153, %s155
      %p159 = scmp.eq.s32.totalorder %s21, 0
      %p160 = por %p158, %p159
      %p161 = scmp.ne.s32.totalorder %s153, %s155
      %p162 = scmp.eq.s32.totalorder %s26, 1
      %p163 = por %p161, %p162
      %p164 = scmp.ne.s32.totalorder %s155, %s156
      %p165 = scmp.eq.s32.totalorder %s26, 0
      %p166 = por %p164, %p165
      %p167 = scmp.ne.s32.totalorder %s155, %s156
      %p168 = scmp.eq.s32.totalorder %s27, 1
      %p169 = por %p167, %p168
      %p171 = scmp.ne.s32.totalorder %s156, %s170
      %p172 = scmp.eq.s32.totalorder %s27, 0
      %p173 = por %p171, %p172
      %s175 = sadd.s32 %s174, 1
      %p178 = scmp.eq.s32.totalorder %s21, 1
      %p179 = scmp.ne.s32.totalorder %s174, %s176
      %p180 = scmp.eq.s32.totalorder %s21, 0
      %p181 = por %p179, %p180
      %p182 = scmp.ne.s32.totalorder %s174, %s176
      %p183 = scmp.eq.s32.totalorder %s26, 1
      %p184 = por %p182, %p183
      %p185 = scmp.ne.s32.totalorder %s176, %s177
      %p186 = scmp.eq.s32.totalorder %s26, 0
      %p187 = por %p185, %p186
      %p188 = scmp.ne.s32.totalorder %s176, %s177
      %p189 = scmp.eq.s32.totalorder %s27, 1
      %p190 = por %p188, %p189
      %p192 = scmp.ne.s32.totalorder %s177, %s191
      %p193 = scmp.eq.s32.totalorder %s27, 0
      %p194 = por %p192, %p193
      %s196 = sadd.s32 %s195, 1
      %p199 = scmp.eq.s32.totalorder %s21, 1
      %p200 = scmp.ne.s32.totalorder %s195, %s197
      %p201 = scmp.eq.s32.totalorder %s21, 0
      %p202 = por %p200, %p201
      %p203 = scmp.ne.s32.totalorder %s195, %s197
      %p204 = scmp.eq.s32.totalorder %s26, 1
      %p205 = por %p203, %p204
      %p206 = scmp.ne.s32.totalorder %s197, %s198
      %p207 = scmp.eq.s32.totalorder %s26, 0
      %p208 = por %p206, %p207
      %p209 = scmp.ne.s32.totalorder %s197, %s198
      %p210 = scmp.eq.s32.totalorder %s27, 1
      %p211 = por %p209, %p210
      %p213 = scmp.ne.s32.totalorder %s198, %s212
      %p214 = scmp.eq.s32.totalorder %s27, 0
      %p215 = por %p213, %p214
      %s217 = sadd.s32 %s216, 1
      %p220 = scmp.eq.s32.totalorder %s21, 1
      %p221 = scmp.ne.s32.totalorder %s216, %s218
      %p222 = scmp.eq.s32.totalorder %s21, 0
      %p223 = por %p221, %p222
      %p224 = scmp.ne.s32.totalorder %s216, %s218
      %p225 = scmp.eq.s32.totalorder %s26, 1
      %p226 = por %p224, %p225
      %p227 = scmp.ne.s32.totalorder %s218, %s219
      %p228 = scmp.eq.s32.totalorder %s26, 0
      %p229 = por %p227, %p228
      %p230 = scmp.ne.s32.totalorder %s218, %s219
      %p231 = scmp.eq.s32.totalorder %s27, 1
      %p232 = por %p230, %p231
      %p234 = scmp.ne.s32.totalorder %s219, %s233
      %p235 = scmp.eq.s32.totalorder %s27, 0
      %p236 = por %p234, %p235
      %s238 = sadd.s32 %s237, 1
      %p241 = scmp.eq.s32.totalorder %s21, 1
      %p242 = scmp.ne.s32.totalorder %s237, %s239
      %p243 = scmp.eq.s32.totalorder %s21, 0
      %p244 = por %p242, %p243
      %p245 = scmp.ne.s32.totalorder %s237, %s239
      %p246 = scmp.eq.s32.totalorder %s26, 1
      %p247 = por %p245, %p246
      %p248 = scmp.ne.s32.totalorder %s239, %s240
      %p249 = scmp.eq.s32.totalorder %s26, 0
      %p250 = por %p248, %p249
      %p251 = scmp.ne.s32.totalorder %s239, %s240
      %p252 = scmp.eq.s32.totalorder %s27, 1
      %p253 = por %p251, %p252
      %p255 = scmp.ne.s32.totalorder %s240, %s254
      %p256 = scmp.eq.s32.totalorder %s27, 0
      %p257 = por %p255, %p256
      %s258 = ssub.s32 %s28, %s40
      %s259 = ssub.s32 %s29, %s36
      %s260 = sor.u32 %s258, %s259
      %p261 = scmp.eq.s32.totalorder %s260, 0
      %s263 = sadd.s32 %s262, 1
      %s264 = scalar_select %p261, %s262, %s263
      %p267 = pneg %p261
      %p268 = scmp.eq.s32.totalorder %s21, 1
      %p269 = por %p267, %p268
      %p270 = scmp.ne.s32.totalorder %s262, %s265
      %p271 = scmp.eq.s32.totalorder %s21, 0
      %p272 = por %p270, %p271
      %p273 = scmp.ne.s32.totalorder %s262, %s265
      %p274 = scmp.eq.s32.totalorder %s26, 1
      %p275 = por %p273, %p274
      %p276 = scmp.ne.s32.totalorder %s265, %s266
      %p277 = scmp.eq.s32.totalorder %s26, 0
      %p278 = por %p276, %p277
      %p279 = scmp.ne.s32.totalorder %s265, %s266
      %p280 = scmp.eq.s32.totalorder %s27, 1
      %p281 = por %p279, %p280
      %p283 = scmp.ne.s32.totalorder %s266, %s282
      %p284 = scmp.eq.s32.totalorder %s27, 0
      %p285 = por %p283, %p284
      %p286 = scmp.le.s32.totalorder 1, %s21
      %p287 = scmp.lt.s32.totalorder %s21, 3
      %p288 = pnand %p286, %p287
      %p289 = pneg %p288
      // Predicated region
      $region9: #{tpu_custom_call.1} parent=5 // pred_check
        _
      $region10: #{tpu_custom_call.1} parent=5 // pred_check_branch
        %291 = sbr.rel (%p288) target = $region12
      $region11: #{tpu_custom_call.1} parent=5 // pred_region
        %s292 = ssub.s32 %s21, 1
        // Predicated region
        $region13: #{tpu_custom_call.1} parent=11 // pred_check
          %p293 = pneg %p82
        $region14: #{tpu_custom_call.1} parent=11 // pred_check_branch
          %295 = sbr.rel (%p293) target = $region16
        $region15: #{tpu_custom_call.1} parent=11 // pred_region
          %s297 = ssub.s32 6144, 6144
          %298 = vsyncadd [#allocation4], %s297
          %s299 = sshll.u32 [#allocation3], 4
          %s300 = int_to_ptr.vmem [resolvable:$true] %s299
          %305 = dma.hbm_to_vmem [thread:$0]  %s1, 6144, %s300, [#allocation4], 128, 128, 8
        $region16: #{tpu_custom_call.1} parent=11 // pred_fallthru
          _
        // Predicated region
        $region17: #{tpu_custom_call.1} parent=11 // pred_check
          %p306 = pneg %p103
        $region18: #{tpu_custom_call.1} parent=11 // pred_check_branch
          %308 = sbr.rel (%p306) target = $region20
        $region19: #{tpu_custom_call.1} parent=11 // pred_region
          _
        $region20: #{tpu_custom_call.1} parent=11 // pred_fallthru
          _
        // Predicated region
        $region21: #{tpu_custom_call.1} parent=11 // pred_check
          %p309 = pneg %p124
        $region22: #{tpu_custom_call.1} parent=11 // pred_check_branch
          %311 = sbr.rel (%p309) target = $region24
        $region23: #{tpu_custom_call.1} parent=11 // pred_region
          _
        $region24: #{tpu_custom_call.1} parent=11 // pred_fallthru
          _
        // Predicated region
        $region25: #{tpu_custom_call.1} parent=11 // pred_check
          %p312 = pneg %p145
        $region26: #{tpu_custom_call.1} parent=11 // pred_check_branch
          %314 = sbr.rel (%p312) target = $region28
        $region27: #{tpu_custom_call.1} parent=11 // pred_region
          %s316 = ssub.s32 6144, 6144
          %317 = vsyncadd [#allocation7], %s316
          %s318 = sshll.u32 [#allocation6], 4
          %s319 = int_to_ptr.vmem [resolvable:$true] %s318
          %324 = dma.hbm_to_vmem [thread:$0]  %s4, 6144, %s319, [#allocation7], 128, 128, 8
        $region28: #{tpu_custom_call.1} parent=11 // pred_fallthru
          _
        // Predicated region
        $region29: #{tpu_custom_call.1} parent=11 // pred_check
          %p325 = pneg %p166
        $region30: #{tpu_custom_call.1} parent=11 // pred_check_branch
          %327 = sbr.rel (%p325) target = $region32
        $region31: #{tpu_custom_call.1} parent=11 // pred_region
          _
        $region32: #{tpu_custom_call.1} parent=11 // pred_fallthru
          _
        // Predicated region
        $region33: #{tpu_custom_call.1} parent=11 // pred_check
          %p328 = pneg %p187
        $region34: #{tpu_custom_call.1} parent=11 // pred_check_branch
          %330 = sbr.rel (%p328) target = $region36
        $region35: #{tpu_custom_call.1} parent=11 // pred_region
          _
        $region36: #{tpu_custom_call.1} parent=11 // pred_fallthru
          _
        // Predicated region
        $region37: #{tpu_custom_call.1} parent=11 // pred_check
          %p331 = pneg %p208
        $region38: #{tpu_custom_call.1} parent=11 // pred_check_branch
          %333 = sbr.rel (%p331) target = $region40
        $region39: #{tpu_custom_call.1} parent=11 // pred_region
          %s335 = ssub.s32 2048, 2048
          %336 = vsyncadd [#allocation7], %s335
          %s337 = sshll.u32 [#allocation8], 4
          %s338 = int_to_ptr.vmem [resolvable:$true] %s337
          %343 = dma.hbm_to_vmem [thread:$0]  %s7, 2048, %s338, [#allocation7], 128, 128, 8
        $region40: #{tpu_custom_call.1} parent=11 // pred_fallthru
          _
        // Predicated region
        $region41: #{tpu_custom_call.1} parent=11 // pred_check
          %p344 = pneg %p229
        $region42: #{tpu_custom_call.1} parent=11 // pred_check_branch
          %346 = sbr.rel (%p344) target = $region44
        $region43: #{tpu_custom_call.1} parent=11 // pred_region
          _
        $region44: #{tpu_custom_call.1} parent=11 // pred_fallthru
          _
        // Predicated region
        $region45: #{tpu_custom_call.1} parent=11 // pred_check
          %p347 = pneg %p250
        $region46: #{tpu_custom_call.1} parent=11 // pred_check_branch
          %349 = sbr.rel (%p347) target = $region48
        $region47: #{tpu_custom_call.1} parent=11 // pred_region
          _
        $region48: #{tpu_custom_call.1} parent=11 // pred_fallthru
          _
      $region12: #{tpu_custom_call.1} parent=5 // pred_fallthru
        _
      %p350 = scmp.lt.s32.totalorder %s21, 2
      // Predicated region
      $region49: #{tpu_custom_call.1} parent=5 // pred_check
        %p351 = pneg %p350
      $region50: #{tpu_custom_call.1} parent=5 // pred_check_branch
        %353 = sbr.rel (%p351) target = $region52
      $region51: #{tpu_custom_call.1} parent=5 // pred_region
        // Predicated region
        $region53: #{tpu_custom_call.1} parent=51 // pred_check
          %p354 = pneg %p55
        $region54: #{tpu_custom_call.1} parent=51 // pred_check_branch
          %356 = sbr.rel (%p354) target = $region56
        $region55: #{tpu_custom_call.1} parent=51 // pred_region
          %p357 = scmp.lt.s32.totalorder %s28, 1
          %s358 = scalar_select %p357, %s28, 1
          %p359 = scmp.lt.s32.totalorder %s29, 0
          %s360 = scalar_select %p359, %s29, 0
          %s361 = smul.addr %s360, 3
          %s362 = smul.addr %s358, 3
          %s363 = sadd.s32 %s361, %s362
          %s364 = smul.addr %s363, 8
          %s365 = scalar_lea.vmem %s0, %s364
        $region56: #{tpu_custom_call.1} parent=51 // pred_fallthru
          _
      $region52: #{tpu_custom_call.1} parent=5 // pred_fallthru
        _
      %p366 = scmp.le.s32.totalorder 1, %s21
      %p367 = scmp.lt.s32.totalorder %s21, 3
      %p368 = pnand %p366, %p367
      %p369 = pneg %p368
      // Predicated region
      $region57: #{tpu_custom_call.1} parent=5 // pred_check
        _
      $region58: #{tpu_custom_call.1} parent=5 // pred_check_branch
        %371 = sbr.rel (%p368) target = $region60
      $region59: #{tpu_custom_call.1} parent=5 // pred_region
        %s372 = ssub.s32 %s21, 1
        // Predicated region
        $region61: #{tpu_custom_call.1} parent=59 // pred_check
          %p373 = pneg %p82
        $region62: #{tpu_custom_call.1} parent=59 // pred_check_branch
          %375 = sbr.rel (%p373) target = $region64
        $region63: #{tpu_custom_call.1} parent=59 // pred_region
          %376 = dma.done [#allocation4], 6144
        $region64: #{tpu_custom_call.1} parent=59 // pred_fallthru
          _
        // Predicated region
        $region65: #{tpu_custom_call.1} parent=59 // pred_check
          %p377 = pneg %p145
        $region66: #{tpu_custom_call.1} parent=59 // pred_check_branch
          %379 = sbr.rel (%p377) target = $region68
        $region67: #{tpu_custom_call.1} parent=59 // pred_region
          %380 = dma.done [#allocation7], 6144
        $region68: #{tpu_custom_call.1} parent=59 // pred_fallthru
          _
        // Predicated region
        $region69: #{tpu_custom_call.1} parent=59 // pred_check
          %p381 = pneg %p208
        $region70: #{tpu_custom_call.1} parent=59 // pred_check_branch
          %383 = sbr.rel (%p381) target = $region72
        $region71: #{tpu_custom_call.1} parent=59 // pred_region
          %384 = dma.done [#allocation7], 2048
        $region72: #{tpu_custom_call.1} parent=59 // pred_fallthru
          _
        %p385 = scmp.lt.s32.totalorder %s30, 1
        %s386 = scalar_select %p385, %s30, 1
        %p387 = scmp.lt.s32.totalorder %s31, 0
        %s388 = scalar_select %p387, %s31, 0
        %s389 = smul.addr %s388, 3
        %s390 = smul.addr %s386, 3
        %s391 = sadd.s32 %s389, %s390
        %s392 = smul.addr %s391, 8
        %s393 = scalar_lea.vmem %s0, %s392
        %p394 = pneg %p61
        %p395 = pneg %p58
        %p396 = pneg %p82
        %p397 = pneg %p79
        %p398 = pneg %p103
        %p399 = pneg %p100
        %p400 = pneg %p124
        %p401 = pneg %p121
        %p402 = pneg %p145
        %p403 = pneg %p142
        %p404 = pneg %p166
        %p405 = pneg %p163
        %p406 = pneg %p187
        %p407 = pneg %p184
        %p408 = pneg %p208
        %p409 = pneg %p205
        %p410 = pneg %p229
        %p411 = pneg %p226
        %p412 = pneg %p250
        %p413 = pneg %p247
        %p414 = pneg %p278
        %p415 = pneg %p275
        %s416 = sand.u32 %s265, 1
        %s417 = scalar_lea.sflag [#allocation5], %s416
        %s418 = sand.u32 %s265, 1
        %s419 = smul.addr %s418, 16
        %s420 = scalar_lea.vmem [#allocation9], %s419
        %p421 = scmp.lt.s32.totalorder %s30, 1
        %s422 = scalar_select %p421, %s30, 1
        %p423 = scmp.lt.s32.totalorder %s31, 0
        %s424 = scalar_select %p423, %s31, 0
        %s425 = smul.addr %s424, 3
        %s426 = smul.addr %s422, 3
        %s427 = sadd.s32 %s425, %s426
        %s428 = smul.addr %s427, 8
        %s429 = scalar_lea.vmem %s0, %s428
        %s430 = smul.u32 2, %s31
        %v431 = vld [vmem:[%s429] sm:$0xff]
        %v432 = vld [vmem:[%s429 + $0x8] sm:$0xff]
        %v433 = vld [vmem:[%s429 + $0x10] sm:$0x3]
        %v434 = vld [vmem:[%s429 + $0x1] sm:$0xff]
        %v435 = vld [vmem:[%s429 + $0x9] sm:$0xff]
        %v436 = vld [vmem:[%s429 + $0x11] sm:$0x3]
        %v437 = vld [vmem:[%s429 + $0x2] sm:$0xff]
        %v438 = vld [vmem:[%s429 + $0xa] sm:$0xff]
        %v439 = vld [vmem:[%s429 + $0x12] sm:$0x3]
        %v440 = vld [vmem:[#allocation3] sm:$0xff]
        %v441 = vld [vmem:[#allocation3 + $0x8] sm:$0xff]
        %v442 = vld [vmem:[#allocation3 + $0x10] sm:$0xff]
        %v443 = vld [vmem:[#allocation3 + $0x18] sm:$0xff]
        %v444 = vld [vmem:[#allocation3 + $0x20] sm:$0xff]
        %v445 = vld [vmem:[#allocation3 + $0x28] sm:$0xff]
        %v446 = vld [vmem:[#allocation3 + $0x30] sm:$0xff]
        %v447 = vld [vmem:[#allocation3 + $0x38] sm:$0xff]
        %v448 = vld [vmem:[#allocation3 + $0x40] sm:$0xff]
        %v449 = vld [vmem:[#allocation3 + $0x48] sm:$0xff]
        %v450 = vld [vmem:[#allocation3 + $0x50] sm:$0xff]
        %v451 = vld [vmem:[#allocation3 + $0x58] sm:$0xff]
        %v452 = vld [vmem:[#allocation3 + $0x60] sm:$0xff]
        %v453 = vld [vmem:[#allocation3 + $0x68] sm:$0xff]
        %v454 = vld [vmem:[#allocation3 + $0x70] sm:$0xff]
        %v455 = vld [vmem:[#allocation3 + $0x78] sm:$0xff]
        %v456 = vld [vmem:[#allocation3 + $0x80] sm:$0xff]
        %v457 = vld [vmem:[#allocation3 + $0x88] sm:$0xff]
        %v458 = vld [vmem:[#allocation3 + $0x90] sm:$0xff]
        %v459 = vld [vmem:[#allocation3 + $0x98] sm:$0xff]
        %v460 = vld [vmem:[#allocation3 + $0xa0] sm:$0xff]
        %v461 = vld [vmem:[#allocation3 + $0xa8] sm:$0xff]
        %v462 = vld [vmem:[#allocation3 + $0xb0] sm:$0xff]
        %v463 = vld [vmem:[#allocation3 + $0xb8] sm:$0xff]
        %v464 = vld [vmem:[#allocation3 + $0xc0] sm:$0xff]
        %v465 = vld [vmem:[#allocation3 + $0xc8] sm:$0xff]
        %v466 = vld [vmem:[#allocation3 + $0xd0] sm:$0xff]
        %v467 = vld [vmem:[#allocation3 + $0xd8] sm:$0xff]
        %v468 = vld [vmem:[#allocation3 + $0xe0] sm:$0xff]
        %v469 = vld [vmem:[#allocation3 + $0xe8] sm:$0xff]
        %v470 = vld [vmem:[#allocation3 + $0xf0] sm:$0xff]
        %v471 = vld [vmem:[#allocation3 + $0xf8] sm:$0xff]
        %v472 = vld [vmem:[#allocation3 + $0x100] sm:$0xff]
        %v473 = vld [vmem:[#allocation3 + $0x108] sm:$0xff]
        %v474 = vld [vmem:[#allocation3 + $0x110] sm:$0xff]
        %v475 = vld [vmem:[#allocation3 + $0x118] sm:$0xff]
        %v476 = vld [vmem:[#allocation3 + $0x120] sm:$0xff]
        %v477 = vld [vmem:[#allocation3 + $0x128] sm:$0xff]
        %v478 = vld [vmem:[#allocation3 + $0x130] sm:$0xff]
        %v479 = vld [vmem:[#allocation3 + $0x138] sm:$0xff]
        %v480 = vld [vmem:[#allocation3 + $0x140] sm:$0xff]
        %v481 = vld [vmem:[#allocation3 + $0x148] sm:$0xff]
        %v482 = vld [vmem:[#allocation3 + $0x150] sm:$0xff]
        %v483 = vld [vmem:[#allocation3 + $0x158] sm:$0xff]
        %v484 = vld [vmem:[#allocation3 + $0x160] sm:$0xff]
        %v485 = vld [vmem:[#allocation3 + $0x168] sm:$0xff]
        %v486 = vld [vmem:[#allocation3 + $0x170] sm:$0xff]
        %v487 = vld [vmem:[#allocation3 + $0x178] sm:$0xff]
        %488 = vmatprep.subr.mxu0 0.0
        %489 = vmatpush1.msra.mxu0 %v440
        %490 = vmatprep.subr.mxu0 0.0
        %491 = vmatpush1.msra.mxu0 %v441
        %492 = vmatprep.subr.mxu0 0.0
        %493 = vmatpush1.msra.mxu0 %v442
        %494 = vmatprep.subr.mxu0 0.0
        %495 = vmatpush1.msra.mxu0 %v443
        %496 = vmatprep.subr.mxu0 0.0
        %497 = vmatpush1.msra.mxu0 %v444
        %498 = vmatprep.subr.mxu0 0.0
        %499 = vmatpush1.msra.mxu0 %v445
        %500 = vmatprep.subr.mxu0 0.0
        %501 = vmatpush1.msra.mxu0 %v446
        %502 = vmatprep.subr.mxu0 0.0
        %503 = vmatpush1.msra.mxu0 %v447
        %504 = vmatprep.subr.mxu0 0.0
        %505 = vmatpush1.msra.mxu0 %v448
        %506 = vmatprep.subr.mxu0 0.0
        %507 = vmatpush1.msra.mxu0 %v449
        %508 = vmatprep.subr.mxu0 0.0
        %509 = vmatpush1.msra.mxu0 %v450
        %510 = vmatprep.subr.mxu0 0.0
        %511 = vmatpush1.msra.mxu0 %v451
        %512 = vmatprep.subr.mxu0 0.0
        %513 = vmatpush1.msra.mxu0 %v452
        %514 = vmatprep.subr.mxu0 0.0
        %515 = vmatpush1.msra.mxu0 %v453
        %516 = vmatprep.subr.mxu0 0.0
        %517 = vmatpush1.msra.mxu0 %v454
        %518 = vmatprep.subr.mxu0 0.0
        %519 = vmatpush1.msra.mxu0 %v455
        %520 = vmatprep.subr.mxu0 0.0
        %521 = vmatpush1.msra.mxu0 %v456
        %522 = vmatprep.subr.mxu0 0.0
        %523 = vmatpush1.msra.mxu0 %v457
        %524 = vmatprep.subr.mxu0 0.0
        %525 = vmatpush1.msra.mxu0 %v458
        %526 = vmatprep.subr.mxu0 0.0
        %527 = vmatpush1.msra.mxu0 %v459
        %528 = vmatprep.subr.mxu0 0.0
        %529 = vmatpush1.msra.mxu0 %v460
        %530 = vmatprep.subr.mxu0 0.0
        %531 = vmatpush1.msra.mxu0 %v461
        %532 = vmatprep.subr.mxu0 0.0
        %533 = vmatpush1.msra.mxu0 %v462
        %534 = vmatprep.subr.mxu0 0.0
        %535 = vmatpush1.msra.mxu0 %v463
        %536 = vmatprep.subr.mxu0 0.0
        %537 = vmatpush1.msra.mxu0 %v464
        %538 = vmatprep.subr.mxu0 0.0
        %539 = vmatpush1.msra.mxu0 %v465
        %540 = vmatprep.subr.mxu0 0.0
        %541 = vmatpush1.msra.mxu0 %v466
        %542 = vmatprep.subr.mxu0 0.0
        %543 = vmatpush1.msra.mxu0 %v467
        %544 = vmatprep.subr.mxu0 0.0
        %545 = vmatpush1.msra.mxu0 %v468
        %546 = vmatprep.subr.mxu0 0.0
        %547 = vmatpush1.msra.mxu0 %v469
        %548 = vmatprep.subr.mxu0 0.0
        %549 = vmatpush1.msra.mxu0 %v470
        %550 = vmatprep.subr.mxu0 0.0
        %551 = vmatpush1.msra.mxu0 %v471
        %552 = vmatprep.mubr.f32.mxu0 %v434
        %553 = vmatmul.mubr.f32.gmra.mrb[0].mxu0 %v431
        %v554 = vpop.f32.mrb[0].mxu0
        %v555 = vadd.f32 0.0, %v554
        %v556 = vpop.f32.mrb[0].mxu0
        %557 = vmatprep.mubr.f32.mxu0 %v435
        %558 = vmatmul.mubr.f32.gmra.mrb[0].mxu0 %v432
        %v559 = vpop.f32.mrb[0].mxu0
        %v560 = vadd.f32 0.0, %v559
        %v561 = vpop.f32.mrb[0].mxu0
        %562 = vmatprep.mubr.f32.mxu0 %v436
        %563 = vmatmul.mubr.f32.gmra.mrb[0].mxu0 %v433
        %v564 = vpop.f32.mrb[0].mxu0
        %v565 = vadd.f32 0.0, %v564
        %v566 = vpop.f32.mrb[0].mxu0
        %567 = vdwg.mxu0
        %568 = vmatprep.subr.mxu0 0.0
        %569 = vmatpush1.msra.mxu0 %v472
        %570 = vmatprep.subr.mxu0 0.0
        %571 = vmatpush1.msra.mxu0 %v473
        %572 = vmatprep.subr.mxu0 0.0
        %573 = vmatpush1.msra.mxu0 %v474
        %574 = vmatprep.subr.mxu0 0.0
        %575 = vmatpush1.msra.mxu0 %v475
        %576 = vmatprep.subr.mxu0 0.0
        %577 = vmatpush1.msra.mxu0 %v476
        %578 = vmatprep.subr.mxu0 0.0
        %579 = vmatpush1.msra.mxu0 %v477
        %580 = vmatprep.subr.mxu0 0.0
        %581 = vmatpush1.msra.mxu0 %v478
        %582 = vmatprep.subr.mxu0 0.0
        %583 = vmatpush1.msra.mxu0 %v479
        %584 = vmatprep.subr.mxu0 0.0
        %585 = vmatpush1.msra.mxu0 %v480
        %586 = vmatprep.subr.mxu0 0.0
        %587 = vmatpush1.msra.mxu0 %v481
        %588 = vmatprep.subr.mxu0 0.0
        %589 = vmatpush1.msra.mxu0 %v482
        %590 = vmatprep.subr.mxu0 0.0
        %591 = vmatpush1.msra.mxu0 %v483
        %592 = vmatprep.subr.mxu0 0.0
        %593 = vmatpush1.msra.mxu0 %v484
        %594 = vmatprep.subr.mxu0 0.0
        %595 = vmatpush1.msra.mxu0 %v485
        %596 = vmatprep.subr.mxu0 0.0
        %597 = vmatpush1.msra.mxu0 %v486
        %598 = vmatprep.subr.mxu0 0.0
        %599 = vmatpush1.msra.mxu0 %v487
        %600 = vmatprep.subr.mxu0 0.0
        %601 = vmatpush1.msra.mxu0 0.0
        %602 = vmatprep.subr.mxu0 0.0
        %603 = vmatpush1.msra.mxu0 0.0
        %604 = vmatprep.subr.mxu0 0.0
        %605 = vmatpush1.msra.mxu0 0.0
        %606 = vmatprep.subr.mxu0 0.0
        %607 = vmatpush1.msra.mxu0 0.0
        %608 = vmatprep.subr.mxu0 0.0
        %609 = vmatpush1.msra.mxu0 0.0
        %610 = vmatprep.subr.mxu0 0.0
        %611 = vmatpush1.msra.mxu0 0.0
        %612 = vmatprep.subr.mxu0 0.0
        %613 = vmatpush1.msra.mxu0 0.0
        %614 = vmatprep.subr.mxu0 0.0
        %615 = vmatpush1.msra.mxu0 0.0
        %616 = vmatprep.subr.mxu0 0.0
        %617 = vmatpush1.msra.mxu0 0.0
        %618 = vmatprep.subr.mxu0 0.0
        %619 = vmatpush1.msra.mxu0 0.0
        %620 = vmatprep.subr.mxu0 0.0
        %621 = vmatpush1.msra.mxu0 0.0
        %622 = vmatprep.subr.mxu0 0.0
        %623 = vmatpush1.msra.mxu0 0.0
        %624 = vmatprep.subr.mxu0 0.0
        %625 = vmatpush1.msra.mxu0 0.0
        %626 = vmatprep.subr.mxu0 0.0
        %627 = vmatpush1.msra.mxu0 0.0
        %628 = vmatprep.subr.mxu0 0.0
        %629 = vmatpush1.msra.mxu0 0.0
        %630 = vmatprep.subr.mxu0 0.0
        %631 = vmatpush1.msra.mxu0 0.0
        %632 = vmatprep.mubr.f32.mxu0 0.0
        %633 = vmatmul.mubr.f32.gmra.mrb[0].mxu0 %v437
        %v634 = vpop.f32.mrb[0].mxu0
        %v635 = vadd.f32 %v555, %v634
        %v636 = vpop.f32.mrb[0].mxu0
        %637 = vmatprep.mubr.f32.mxu0 0.0
        %638 = vmatmul.mubr.f32.gmra.mrb[0].mxu0 %v438
        %v639 = vpop.f32.mrb[0].mxu0
        %v640 = vadd.f32 %v560, %v639
        %v641 = vpop.f32.mrb[0].mxu0
        %642 = vmatprep.mubr.f32.mxu0 0.0
        %643 = vmatmul.mubr.f32.gmra.mrb[0].mxu0 %v439
        %v644 = vpop.f32.mrb[0].mxu0
        %v645 = vadd.f32 %v565, %v644
        %v646 = vpop.f32.mrb[0].mxu0
        %647 = vdwg.mxu0
        %v648 = vld [vmem:[%s2] sm:$0x1]
        %v650 = vlaneseq
        %v651 = vshrl.u32 %v650, 7
        %v652 = vsub.s32 0, %v651
        %v653 = vrot.slane %v648, %v652
        %v655 = vmul.f32 %v635, %v653
        %v656 = vmul.f32 %v640, %v653
        %v657 = vmul.f32 %v645, %v653
        %v658 = vld [vmem:[%s3] sm:$0x1]
        %v660 = vlaneseq
        %v661 = vshrl.u32 %v660, 7
        %v662 = vsub.s32 0, %v661
        %v663 = vrot.slane %v658, %v662
        %v665 = vadd.f32 %v655, %v663
        %v666 = vadd.f32 %v656, %v663
        %v667 = vadd.f32 %v657, %v663
        %v668 = vmax.f32 %v665, 0.0
        %v669 = vmax.f32 %v666, 0.0
        %v670 = vmax.f32 %v667, 0.0
        %s671 = smul.u32 %s31, 16
        %s672 = ssub.s32 %s671, 1
        %v673 = vlaneseq
        %v674 = vshrl.u32 %v673, 7
        %v675 = vadd.s32 %v674, 8
        %v676 = vadd.s32 %v674, 16
        %v677 = vstv %s672
        %v678 = vadd.s32 %v677, %v674
        %v679 = vadd.s32 %v677, %v675
        %v680 = vadd.s32 %v677, %v676
        %vm681 = vcmp.ge.s32.totalorder %v678, 0
        %vm682 = vcmp.ge.s32.totalorder %v679, 0
        %vm683 = vcmp.ge.s32.totalorder %v680, 0
        %vm684 = vcmp.lt.s32.totalorder %v678, 16
        %vm685 = vcmp.lt.s32.totalorder %v679, 16
        %vm686 = vcmp.lt.s32.totalorder %v680, 16
        %vm687 = vmand %vm681, %vm684
        %vm688 = vmand %vm682, %vm685
        %vm689 = vmand %vm683, %vm686
        %v690 = vsel %vm687, 1, 0
        %v691 = vsel %vm688, 1, 0
        %v692 = vsel %vm689, 1, 0
        %vm693 = vcmp.eq.s32.totalorder %v690, 1
        %vm694 = vcmp.eq.s32.totalorder %v691, 1
        %vm695 = vcmp.eq.s32.totalorder %v692, 1
        %v696 = vsel %vm693, %v668, 0.0
        %v697 = vsel %vm694, %v669, 0.0
        %v698 = vsel %vm695, %v670, 0.0
        %699 = vst [vmem:[#allocation2] sm:$0xff] %v696
        %700 = vst [vmem:[#allocation2 + $0x8] sm:$0xff] %v697
        %701 = vst [vmem:[#allocation2 + $0x10] sm:$0x3] %v698
        %v702 = vld [vmem:[#allocation2] sm:$0xff]
        %v703 = vld [vmem:[#allocation2 + $0x8] sm:$0xff]
        %v704 = vld [vmem:[#allocation2 + $0x1] sm:$0xff]
        %v705 = vld [vmem:[#allocation2 + $0x9] sm:$0xff]
        %v706 = vld [vmem:[#allocation2 + $0x2] sm:$0xff]
        %v707 = vld [vmem:[#allocation2 + $0xa] sm:$0xff]
        %v708 = vld [vmem:[#allocation6] sm:$0xff]
        %v709 = vld [vmem:[#allocation6 + $0x8] sm:$0xff]
        %v710 = vld [vmem:[#allocation6 + $0x10] sm:$0xff]
        %v711 = vld [vmem:[#allocation6 + $0x18] sm:$0xff]
        %v712 = vld [vmem:[#allocation6 + $0x20] sm:$0xff]
        %v713 = vld [vmem:[#allocation6 + $0x28] sm:$0xff]
        %v714 = vld [vmem:[#allocation6 + $0x30] sm:$0xff]
        %v715 = vld [vmem:[#allocation6 + $0x38] sm:$0xff]
        %v716 = vld [vmem:[#allocation6 + $0x40] sm:$0xff]
        %v717 = vld [vmem:[#allocation6 + $0x48] sm:$0xff]
        %v718 = vld [vmem:[#allocation6 + $0x50] sm:$0xff]
        %v719 = vld [vmem:[#allocation6 + $0x58] sm:$0xff]
        %v720 = vld [vmem:[#allocation6 + $0x60] sm:$0xff]
        %v721 = vld [vmem:[#allocation6 + $0x68] sm:$0xff]
        %v722 = vld [vmem:[#allocation6 + $0x70] sm:$0xff]
        %v723 = vld [vmem:[#allocation6 + $0x78] sm:$0xff]
        %v724 = vld [vmem:[#allocation6 + $0x80] sm:$0xff]
        %v725 = vld [vmem:[#allocation6 + $0x88] sm:$0xff]
        %v726 = vld [vmem:[#allocation6 + $0x90] sm:$0xff]
        %v727 = vld [vmem:[#allocation6 + $0x98] sm:$0xff]
        %v728 = vld [vmem:[#allocation6 + $0xa0] sm:$0xff]
        %v729 = vld [vmem:[#allocation6 + $0xa8] sm:$0xff]
        %v730 = vld [vmem:[#allocation6 + $0xb0] sm:$0xff]
        %v731 = vld [vmem:[#allocation6 + $0xb8] sm:$0xff]
        %v732 = vld [vmem:[#allocation6 + $0xc0] sm:$0xff]
        %v733 = vld [vmem:[#allocation6 + $0xc8] sm:$0xff]
        %v734 = vld [vmem:[#allocation6 + $0xd0] sm:$0xff]
        %v735 = vld [vmem:[#allocation6 + $0xd8] sm:$0xff]
        %v736 = vld [vmem:[#allocation6 + $0xe0] sm:$0xff]
        %v737 = vld [vmem:[#allocation6 + $0xe8] sm:$0xff]
        %v738 = vld [vmem:[#allocation6 + $0xf0] sm:$0xff]
        %v739 = vld [vmem:[#allocation6 + $0xf8] sm:$0xff]
        %v740 = vld [vmem:[#allocation6 + $0x100] sm:$0xff]
        %v741 = vld [vmem:[#allocation6 + $0x108] sm:$0xff]
        %v742 = vld [vmem:[#allocation6 + $0x110] sm:$0xff]
        %v743 = vld [vmem:[#allocation6 + $0x118] sm:$0xff]
        %v744 = vld [vmem:[#allocation6 + $0x120] sm:$0xff]
        %v745 = vld [vmem:[#allocation6 + $0x128] sm:$0xff]
        %v746 = vld [vmem:[#allocation6 + $0x130] sm:$0xff]
        %v747 = vld [vmem:[#allocation6 + $0x138] sm:$0xff]
        %v748 = vld [vmem:[#allocation6 + $0x140] sm:$0xff]
        %v749 = vld [vmem:[#allocation6 + $0x148] sm:$0xff]
        %v750 = vld [vmem:[#allocation6 + $0x150] sm:$0xff]
        %v751 = vld [vmem:[#allocation6 + $0x158] sm:$0xff]
        %v752 = vld [vmem:[#allocation6 + $0x160] sm:$0xff]
        %v753 = vld [vmem:[#allocation6 + $0x168] sm:$0xff]
        %v754 = vld [vmem:[#allocation6 + $0x170] sm:$0xff]
        %v755 = vld [vmem:[#allocation6 + $0x178] sm:$0xff]
        %756 = vmatprep.subr.mxu0 0.0
        %757 = vmatpush1.msra.mxu0 %v708
        %758 = vmatprep.subr.mxu0 0.0
        %759 = vmatpush1.msra.mxu0 %v709
        %760 = vmatprep.subr.mxu0 0.0
        %761 = vmatpush1.msra.mxu0 %v710
        %762 = vmatprep.subr.mxu0 0.0
        %763 = vmatpush1.msra.mxu0 %v711
        %764 = vmatprep.subr.mxu0 0.0
        %765 = vmatpush1.msra.mxu0 %v712
        %766 = vmatprep.subr.mxu0 0.0
        %767 = vmatpush1.msra.mxu0 %v713
        %768 = vmatprep.subr.mxu0 0.0
        %769 = vmatpush1.msra.mxu0 %v714
        %770 = vmatprep.subr.mxu0 0.0
        %771 = vmatpush1.msra.mxu0 %v715
        %772 = vmatprep.subr.mxu0 0.0
        %773 = vmatpush1.msra.mxu0 %v716
        %774 = vmatprep.subr.mxu0 0.0
        %775 = vmatpush1.msra.mxu0 %v717
        %776 = vmatprep.subr.mxu0 0.0
        %777 = vmatpush1.msra.mxu0 %v718
        %778 = vmatprep.subr.mxu0 0.0
        %779 = vmatpush1.msra.mxu0 %v719
        %780 = vmatprep.subr.mxu0 0.0
        %781 = vmatpush1.msra.mxu0 %v720
        %782 = vmatprep.subr.mxu0 0.0
        %783 = vmatpush1.msra.mxu0 %v721
        %784 = vmatprep.subr.mxu0 0.0
        %785 = vmatpush1.msra.mxu0 %v722
        %786 = vmatprep.subr.mxu0 0.0
        %787 = vmatpush1.msra.mxu0 %v723
        %788 = vmatprep.subr.mxu0 0.0
        %789 = vmatpush1.msra.mxu0 %v724
        %790 = vmatprep.subr.mxu0 0.0
        %791 = vmatpush1.msra.mxu0 %v725
        %792 = vmatprep.subr.mxu0 0.0
        %793 = vmatpush1.msra.mxu0 %v726
        %794 = vmatprep.subr.mxu0 0.0
        %795 = vmatpush1.msra.mxu0 %v727
        %796 = vmatprep.subr.mxu0 0.0
        %797 = vmatpush1.msra.mxu0 %v728
        %798 = vmatprep.subr.mxu0 0.0
        %799 = vmatpush1.msra.mxu0 %v729
        %800 = vmatprep.subr.mxu0 0.0
        %801 = vmatpush1.msra.mxu0 %v730
        %802 = vmatprep.subr.mxu0 0.0
        %803 = vmatpush1.msra.mxu0 %v731
        %804 = vmatprep.subr.mxu0 0.0
        %805 = vmatpush1.msra.mxu0 %v732
        %806 = vmatprep.subr.mxu0 0.0
        %807 = vmatpush1.msra.mxu0 %v733
        %808 = vmatprep.subr.mxu0 0.0
        %809 = vmatpush1.msra.mxu0 %v734
        %810 = vmatprep.subr.mxu0 0.0
        %811 = vmatpush1.msra.mxu0 %v735
        %812 = vmatprep.subr.mxu0 0.0
        %813 = vmatpush1.msra.mxu0 %v736
        %814 = vmatprep.subr.mxu0 0.0
        %815 = vmatpush1.msra.mxu0 %v737
        %816 = vmatprep.subr.mxu0 0.0
        %817 = vmatpush1.msra.mxu0 %v738
        %818 = vmatprep.subr.mxu0 0.0
        %819 = vmatpush1.msra.mxu0 %v739
        %820 = vmatprep.mubr.f32.mxu0 %v704
        %821 = vmatmul.mubr.f32.gmra.mrb[0].mxu0 %v702
        %v822 = vpop.f32.mrb[0].mxu0
        %v823 = vadd.f32 0.0, %v822
        %v824 = vpop.f32.mrb[0].mxu0
        %825 = vmatprep.mubr.f32.mxu0 %v705
        %826 = vmatmul.mubr.f32.gmra.mrb[0].mxu0 %v703
        %v827 = vpop.f32.mrb[0].mxu0
        %v828 = vadd.f32 0.0, %v827
        %v829 = vpop.f32.mrb[0].mxu0
        %830 = vdwg.mxu0
        %831 = vmatprep.subr.mxu0 0.0
        %832 = vmatpush1.msra.mxu0 %v740
        %833 = vmatprep.subr.mxu0 0.0
        %834 = vmatpush1.msra.mxu0 %v741
        %835 = vmatprep.subr.mxu0 0.0
        %836 = vmatpush1.msra.mxu0 %v742
        %837 = vmatprep.subr.mxu0 0.0
        %838 = vmatpush1.msra.mxu0 %v743
        %839 = vmatprep.subr.mxu0 0.0
        %840 = vmatpush1.msra.mxu0 %v744
        %841 = vmatprep.subr.mxu0 0.0
        %842 = vmatpush1.msra.mxu0 %v745
        %843 = vmatprep.subr.mxu0 0.0
        %844 = vmatpush1.msra.mxu0 %v746
        %845 = vmatprep.subr.mxu0 0.0
        %846 = vmatpush1.msra.mxu0 %v747
        %847 = vmatprep.subr.mxu0 0.0
        %848 = vmatpush1.msra.mxu0 %v748
        %849 = vmatprep.subr.mxu0 0.0
        %850 = vmatpush1.msra.mxu0 %v749
        %851 = vmatprep.subr.mxu0 0.0
        %852 = vmatpush1.msra.mxu0 %v750
        %853 = vmatprep.subr.mxu0 0.0
        %854 = vmatpush1.msra.mxu0 %v751
        %855 = vmatprep.subr.mxu0 0.0
        %856 = vmatpush1.msra.mxu0 %v752
        %857 = vmatprep.subr.mxu0 0.0
        %858 = vmatpush1.msra.mxu0 %v753
        %859 = vmatprep.subr.mxu0 0.0
        %860 = vmatpush1.msra.mxu0 %v754
        %861 = vmatprep.subr.mxu0 0.0
        %862 = vmatpush1.msra.mxu0 %v755
        %863 = vmatprep.subr.mxu0 0.0
        %864 = vmatpush1.msra.mxu0 0.0
        %865 = vmatprep.subr.mxu0 0.0
        %866 = vmatpush1.msra.mxu0 0.0
        %867 = vmatprep.subr.mxu0 0.0
        %868 = vmatpush1.msra.mxu0 0.0
        %869 = vmatprep.subr.mxu0 0.0
        %870 = vmatpush1.msra.mxu0 0.0
        %871 = vmatprep.subr.mxu0 0.0
        %872 = vmatpush1.msra.mxu0 0.0
        %873 = vmatprep.subr.mxu0 0.0
        %874 = vmatpush1.msra.mxu0 0.0
        %875 = vmatprep.subr.mxu0 0.0
        %876 = vmatpush1.msra.mxu0 0.0
        %877 = vmatprep.subr.mxu0 0.0
        %878 = vmatpush1.msra.mxu0 0.0
        %879 = vmatprep.subr.mxu0 0.0
        %880 = vmatpush1.msra.mxu0 0.0
        %881 = vmatprep.subr.mxu0 0.0
        %882 = vmatpush1.msra.mxu0 0.0
        %883 = vmatprep.subr.mxu0 0.0
        %884 = vmatpush1.msra.mxu0 0.0
        %885 = vmatprep.subr.mxu0 0.0
        %886 = vmatpush1.msra.mxu0 0.0
        %887 = vmatprep.subr.mxu0 0.0
        %888 = vmatpush1.msra.mxu0 0.0
        %889 = vmatprep.subr.mxu0 0.0
        %890 = vmatpush1.msra.mxu0 0.0
        %891 = vmatprep.subr.mxu0 0.0
        %892 = vmatpush1.msra.mxu0 0.0
        %893 = vmatprep.subr.mxu0 0.0
        %894 = vmatpush1.msra.mxu0 0.0
        %895 = vmatprep.mubr.f32.mxu0 0.0
        %896 = vmatmul.mubr.f32.gmra.mrb[0].mxu0 %v706
        %v897 = vpop.f32.mrb[0].mxu0
        %v898 = vadd.f32 %v823, %v897
        %v899 = vpop.f32.mrb[0].mxu0
        %900 = vmatprep.mubr.f32.mxu0 0.0
        %901 = vmatmul.mubr.f32.gmra.mrb[0].mxu0 %v707
        %v902 = vpop.f32.mrb[0].mxu0
        %v903 = vadd.f32 %v828, %v902
        %v904 = vpop.f32.mrb[0].mxu0
        %905 = vdwg.mxu0
        %v906 = vld [vmem:[%s5] sm:$0x1]
        %v908 = vlaneseq
        %v909 = vshrl.u32 %v908, 7
        %v910 = vsub.s32 0, %v909
        %v911 = vrot.slane %v906, %v910
        %v913 = vmul.f32 %v898, %v911
        %v914 = vmul.f32 %v903, %v911
        %v915 = vld [vmem:[%s6] sm:$0x1]
        %v917 = vlaneseq
        %v918 = vshrl.u32 %v917, 7
        %v919 = vsub.s32 0, %v918
        %v920 = vrot.slane %v915, %v919
        %v922 = vadd.f32 %v913, %v920
        %v923 = vadd.f32 %v914, %v920
        %v924 = vld [vmem:[%s429 + $0x2] sm:$0xff]
        %v925 = vld [vmem:[%s429 + $0xa] sm:$0xff]
        %v926 = vld [vmem:[#allocation8] sm:$0xff]
        %v927 = vld [vmem:[#allocation8 + $0x8] sm:$0xff]
        %v928 = vld [vmem:[#allocation8 + $0x10] sm:$0xff]
        %v929 = vld [vmem:[#allocation8 + $0x18] sm:$0xff]
        %v930 = vld [vmem:[#allocation8 + $0x20] sm:$0xff]
        %v931 = vld [vmem:[#allocation8 + $0x28] sm:$0xff]
        %v932 = vld [vmem:[#allocation8 + $0x30] sm:$0xff]
        %v933 = vld [vmem:[#allocation8 + $0x38] sm:$0xff]
        %v934 = vld [vmem:[#allocation8 + $0x40] sm:$0xff]
        %v935 = vld [vmem:[#allocation8 + $0x48] sm:$0xff]
        %v936 = vld [vmem:[#allocation8 + $0x50] sm:$0xff]
        %v937 = vld [vmem:[#allocation8 + $0x58] sm:$0xff]
        %v938 = vld [vmem:[#allocation8 + $0x60] sm:$0xff]
        %v939 = vld [vmem:[#allocation8 + $0x68] sm:$0xff]
        %v940 = vld [vmem:[#allocation8 + $0x70] sm:$0xff]
        %v941 = vld [vmem:[#allocation8 + $0x78] sm:$0xff]
        %942 = vmatprep.subr.mxu0 0.0
        %943 = vmatpush1.msra.mxu0 %v926
        %944 = vmatprep.subr.mxu0 0.0
        %945 = vmatpush1.msra.mxu0 %v927
        %946 = vmatprep.subr.mxu0 0.0
        %947 = vmatpush1.msra.mxu0 %v928
        %948 = vmatprep.subr.mxu0 0.0
        %949 = vmatpush1.msra.mxu0 %v929
        %950 = vmatprep.subr.mxu0 0.0
        %951 = vmatpush1.msra.mxu0 %v930
        %952 = vmatprep.subr.mxu0 0.0
        %953 = vmatpush1.msra.mxu0 %v931
        %954 = vmatprep.subr.mxu0 0.0
        %955 = vmatpush1.msra.mxu0 %v932
        %956 = vmatprep.subr.mxu0 0.0
        %957 = vmatpush1.msra.mxu0 %v933
        %958 = vmatprep.subr.mxu0 0.0
        %959 = vmatpush1.msra.mxu0 %v934
        %960 = vmatprep.subr.mxu0 0.0
        %961 = vmatpush1.msra.mxu0 %v935
        %962 = vmatprep.subr.mxu0 0.0
        %963 = vmatpush1.msra.mxu0 %v936
        %964 = vmatprep.subr.mxu0 0.0
        %965 = vmatpush1.msra.mxu0 %v937
        %966 = vmatprep.subr.mxu0 0.0
        %967 = vmatpush1.msra.mxu0 %v938
        %968 = vmatprep.subr.mxu0 0.0
        %969 = vmatpush1.msra.mxu0 %v939
        %970 = vmatprep.subr.mxu0 0.0
        %971 = vmatpush1.msra.mxu0 %v940
        %972 = vmatprep.subr.mxu0 0.0
        %973 = vmatpush1.msra.mxu0 %v941
        %974 = vmatprep.subr.mxu0 0.0
        %975 = vmatpush1.msra.mxu0 0.0
        %976 = vmatprep.subr.mxu0 0.0
        %977 = vmatpush1.msra.mxu0 0.0
        %978 = vmatprep.subr.mxu0 0.0
        %979 = vmatpush1.msra.mxu0 0.0
        %980 = vmatprep.subr.mxu0 0.0
        %981 = vmatpush1.msra.mxu0 0.0
        %982 = vmatprep.subr.mxu0 0.0
        %983 = vmatpush1.msra.mxu0 0.0
        %984 = vmatprep.subr.mxu0 0.0
        %985 = vmatpush1.msra.mxu0 0.0
        %986 = vmatprep.subr.mxu0 0.0
        %987 = vmatpush1.msra.mxu0 0.0
        %988 = vmatprep.subr.mxu0 0.0
        %989 = vmatpush1.msra.mxu0 0.0
        %990 = vmatprep.subr.mxu0 0.0
        %991 = vmatpush1.msra.mxu0 0.0
        %992 = vmatprep.subr.mxu0 0.0
        %993 = vmatpush1.msra.mxu0 0.0
        %994 = vmatprep.subr.mxu0 0.0
        %995 = vmatpush1.msra.mxu0 0.0
        %996 = vmatprep.subr.mxu0 0.0
        %997 = vmatpush1.msra.mxu0 0.0
        %998 = vmatprep.subr.mxu0 0.0
        %999 = vmatpush1.msra.mxu0 0.0
        %1000 = vmatprep.subr.mxu0 0.0
        %1001 = vmatpush1.msra.mxu0 0.0
        %1002 = vmatprep.subr.mxu0 0.0
        %1003 = vmatpush1.msra.mxu0 0.0
        %1004 = vmatprep.subr.mxu0 0.0
        %1005 = vmatpush1.msra.mxu0 0.0
        %1006 = vmatprep.mubr.f32.mxu0 0.0
        %1007 = vmatmul.mubr.f32.gmra.mrb[0].mxu0 %v924
        %v1008 = vpop.f32.mrb[0].mxu0
        %v1009 = vadd.f32 0.0, %v1008
        %v1010 = vpop.f32.mrb[0].mxu0
        %1011 = vmatprep.mubr.f32.mxu0 0.0
        %1012 = vmatmul.mubr.f32.gmra.mrb[0].mxu0 %v925
        %v1013 = vpop.f32.mrb[0].mxu0
        %v1014 = vadd.f32 0.0, %v1013
        %v1015 = vpop.f32.mrb[0].mxu0
        %1016 = vdwg.mxu0
        %v1017 = vld [vmem:[%s8] sm:$0x1]
        %v1019 = vlaneseq
        %v1020 = vshrl.u32 %v1019, 7
        %v1021 = vsub.s32 0, %v1020
        %v1022 = vrot.slane %v1017, %v1021
        %v1024 = vmul.f32 %v1009, %v1022
        %v1025 = vmul.f32 %v1014, %v1022
        %v1026 = vld [vmem:[%s9] sm:$0x1]
        %v1028 = vlaneseq
        %v1029 = vshrl.u32 %v1028, 7
        %v1030 = vsub.s32 0, %v1029
        %v1031 = vrot.slane %v1026, %v1030
        %v1033 = vadd.f32 %v1024, %v1031
        %v1034 = vadd.f32 %v1025, %v1031
        %v1035 = vadd.f32 %v922, %v1033
        %v1036 = vadd.f32 %v923, %v1034
        %v1037 = vmax.f32 %v1035, 0.0
        %v1038 = vmax.f32 %v1036, 0.0
        %1039 = vst [vmem:[%s420] sm:$0xff] %v1037
        %1040 = vst [vmem:[%s420 + $0x8] sm:$0xff] %v1038
        %s1041 = sand.u32 %s265, 1
        %s1042 = scalar_lea.sflag [#allocation5], %s1041
        %s1043 = sand.u32 %s265, 1
        %s1044 = smul.addr %s1043, 16
        %s1045 = scalar_lea.vmem [#allocation9], %s1044
        // Predicated region
        $region73: #{tpu_custom_call.1} parent=59 // pred_check
          %p1046 = pneg %p275
        $region74: #{tpu_custom_call.1} parent=59 // pred_check_branch
          %1048 = sbr.rel (%p1046) target = $region76
        $region75: #{tpu_custom_call.1} parent=59 // pred_region
          %s1049 = smul.u32 2, %s31
          %s1051 = ssub.s32 256, 256
          %1052 = vsyncadd %s1042, %s1051
          %s1053 = smul.addr %s30, 2
          %s1054 = sadd.s32 %s1049, %s1053
          %s1055 = smul.addr %s1054, 128
          %s1056 = scalar_lea.hbm %s10, %s1055
          %s1057 = sshll.u32 %s1045, 4
          %s1058 = int_to_ptr.vmem [resolvable:$true] %s1057
          %1063 = dma.vmem_to_hbm [thread:$0]  %s1058, 256, %s1056, %s1042, 128, 128, 8
        $region76: #{tpu_custom_call.1} parent=59 // pred_fallthru
          _
      $region60: #{tpu_custom_call.1} parent=5 // pred_fallthru
        _
      %p1064 = scmp.le.s32.totalorder 2, %s21
      // Predicated region
      $region77: #{tpu_custom_call.1} parent=5 // pred_check
        %p1065 = pneg %p1064
      $region78: #{tpu_custom_call.1} parent=5 // pred_check_branch
        %1067 = sbr.rel (%p1065) target = $region80
      $region79: #{tpu_custom_call.1} parent=5 // pred_region
        %s1068 = ssub.s32 %s21, 2
        // Predicated region
        $region81: #{tpu_custom_call.1} parent=79 // pred_check
          %p1069 = pneg %p281
        $region82: #{tpu_custom_call.1} parent=79 // pred_check_branch
          %1071 = sbr.rel (%p1069) target = $region84
        $region83: #{tpu_custom_call.1} parent=79 // pred_region
          %s1072 = sand.u32 %s266, 1
          %s1073 = scalar_lea.sflag [#allocation5], %s1072
          %s1074 = sand.u32 %s266, 1
          %s1075 = smul.addr %s1074, 16
          %s1076 = scalar_lea.vmem [#allocation9], %s1075
          %1077 = dma.done %s1073, 256
        $region84: #{tpu_custom_call.1} parent=79 // pred_fallthru
          _
      $region80: #{tpu_custom_call.1} parent=5 // pred_fallthru
        _
    $region6: #{tpu_custom_call.1} parent=1 // loop_footer
      %s25 = sadd.s32 1, %s21
    $region7: #{tpu_custom_call.1} parent=1 // loop_footer_branch
      %20 = sbr.rel target = $region3
    $region8: #{tpu_custom_call.1} parent=1 // loop_exit
      _
    %1078 = vsyncpa [#allocation4], 1
    %s1079 = scalar_lea.sflag [#allocation4], 1
    %1080 = vsyncpa %s1079, 1
    %1081 = vsyncpa [#allocation7], 1
    %1082 = vsyncpa [#allocation5], 1
    %s1083 = scalar_lea.sflag [#allocation5], 1
    %1084 = vsyncpa %s1083, 1

</llo_original>
